<compile_context>
chip_gen: v7x
topology: tpu7x:2x2x1
jax: 0.10.0
libtpu: 0.0.40
codegen_flags: <defaults>
</compile_context>

<pallas_src>
import functools

import jax
import jax.numpy as jnp
from jax.experimental import pallas as pl
from jax.experimental.pallas import tpu as pltpu

BN_EPS = 1e-5
LANE = 128
SUBLANE_BF16 = 16  # bf16 packs 2 rows per sublane -> keep batch tiles multiples of 16
TM_MAX = 512       # sweep-recommended batch tile for large batches


def _round_up(n, m):
    return ((n + m - 1) // m) * m


# ----------------------------- Pallas kernel -----------------------------

def _fused_mlp_kernel(num_blocks, h_pads, x_ref, *refs):
    """Fused forward for one batch tile.

    refs = [W_0, b_0, ..., W_{L-1}, b_{L-1}, W_out, b_out, out_ref]
    W_i:   (prev_pad, 2*h_pad_i) bf16, BN folded, a-half in lanes [:h_pad], g-half in [h_pad:].
    b_i:   (1, 2*h_pad_i) f32.
    """
    out_ref = refs[-1]
    params = refs[:-1]

    h = x_ref[...]  # bf16
    idx = 0
    for li in range(num_blocks):
        w_ref, b_ref = params[idx], params[idx + 1]
        idx += 2
        # One MXU matmul covering both GLU halves; f32 accumulation.
        z = jnp.dot(h, w_ref[...], preferred_element_type=jnp.float32) + b_ref[...]
        hp = h_pads[li]
        a = z[:, :hp]        # lane-block aligned slice (hp % 128 == 0) -> no lane crossing
        g = z[:, hp:]
        # GLU in f32 (v5e VPU/EUP have no bf16); padded lanes stay exactly 0 (0 * sigmoid(0)).
        h = (a * jax.nn.sigmoid(g)).astype(jnp.bfloat16)
    # TODO(synk): Dropout is identity in eval mode; training-mode dropout (pltpu.prng_* mask) not implemented.
    w_ref, b_ref = params[idx], params[idx + 1]
    out_ref[...] = (jnp.dot(h, w_ref[...], preferred_element_type=jnp.float32)
                    + b_ref[...]).astype(out_ref.dtype)


# ------------------ host-side prep: BN fold + GLU merge + pad + bf16 cast ------------------

def _prepare_params(block_params, out_params, input_size):
    """Fold BN into Linear (f32), keep GLU halves in one lane-padded weight, cast weights to bf16."""
    flat = []
    h_pads = []
    prev, prev_pad = input_size, _round_up(input_size, LANE)
    for p in block_params:
        w, b = p["w"], p["b"]                       # w: (prev, 2h), b: (2h,)
        gamma, beta, mean, var = p["gamma"], p["beta"], p["mean"], p["var"]
        two_h = w.shape[1]
        assert two_h % 2 == 0, "GLU requires an even feature dimension"
        h = two_h // 2

        scale = gamma * jax.lax.rsqrt(var + BN_EPS)
        w_f = w * scale[None, :]                    # BN fold in f32
        b_f = (b - mean) * scale + beta

        h_pad = _round_up(h, LANE)
        w_p = jnp.zeros((prev_pad, 2 * h_pad), jnp.float32)
        w_p = w_p.at[:prev, :h].set(w_f[:, :h])                 # a-half -> lanes [0, h)
        w_p = w_p.at[:prev, h_pad:h_pad + h].set(w_f[:, h:])    # g-half -> lanes [h_pad, h_pad+h)
        b_p = jnp.zeros((1, 2 * h_pad), jnp.float32)
        b_p = b_p.at[0, :h].set(b_f[:h]).at[0, h_pad:h_pad + h].set(b_f[h:])

        flat += [w_p.astype(jnp.bfloat16), b_p]     # weight bf16, bias f32
        h_pads.append(h_pad)
        prev, prev_pad = h, h_pad

    w_out, b_out = out_params                       # (prev, out), (out,)
    out_size = w_out.shape[1]
    out_pad = _round_up(out_size, LANE)
    w_out_p = (jnp.zeros((prev_pad, out_pad), jnp.float32)
               .at[:prev, :out_size].set(w_out)).astype(jnp.bfloat16)
    b_out_p = jnp.zeros((1, out_pad), jnp.float32).at[0, :out_size].set(b_out)
    flat += [w_out_p, b_out_p]

    in_pad = _round_up(input_size, LANE)
    return flat, tuple(h_pads), in_pad, out_pad, out_size


def _pick_batch_tile(n):
    """Batch tile <= 512 rows, multiple of 16 (bf16 sublane), and always >= 2 grid tiles."""
    tm = _round_up(min(max(n, 1), TM_MAX), SUBLANE_BF16)
    tm = min(tm, TM_MAX)
    n_pad = max(_round_up(n, tm), 2 * tm)   # >= 2 tiles so both v7x TensorCores get work
    return tm, n_pad


# ----------------------------- forward factory -----------------------------

def make_temporalnet_forward(block_params, out_params, input_size):
    """Prepare padded/folded params ONCE; return a cached, jitted eval-mode forward."""
    flat, h_pads, in_pad, out_pad, out_size = _prepare_params(block_params, out_params, input_size)
    flat = [jnp.asarray(p) for p in flat]
    num_blocks = len(h_pads)
    weight_bytes = sum(int(p.size) * p.dtype.itemsize for p in flat)
    dot_elems = sum(int(flat[2 * i].shape[0]) * int(flat[2 * i].shape[1])
                    for i in range(num_blocks + 1))     # sum K_pad * N_pad over all matmuls
    max_width = max([in_pad, out_pad] + [2 * hp for hp in h_pads])

    def build(n, single_buffer_weights):
        tm, n_pad = _pick_batch_tile(n)
        grid = (n_pad // tm,)

        x_spec = pl.BlockSpec((tm, in_pad), lambda i: (i, 0))
        w_specs = []
        for p in flat:
            if single_buffer_weights:
                # Constant-index, fully resident: no point double-buffering -> halve VMEM footprint.
                spec = pl.BlockSpec(p.shape, lambda i: (0, 0),
                                    pipeline_mode=pl.Buffered(buffer_count=1))
            else:
                spec = pl.BlockSpec(p.shape, lambda i: (0, 0))
            w_specs.append(spec)
        out_spec = pl.BlockSpec((tm, out_pad), lambda i: (i, 0))

        # Explicit VMEM budget: weights (x buffer count) + double-buffered x/out tiles + headroom.
        w_bufs = 1 if single_buffer_weights else 2
        vmem_est = (w_bufs * weight_bytes
                    + 2 * tm * in_pad * 2           # x tiles (bf16)
                    + 2 * tm * out_pad * 4          # out tiles (f32)
                    + 4 * tm * max_width * 4)       # activation scratch headroom
        vmem_limit = int(min(max(vmem_est + (8 << 20), 32 << 20), 64 << 20))

        cost = pl.CostEstimate(
            flops=int(2 * n_pad * dot_elems),
            transcendentals=int(n_pad * sum(h_pads)),
            bytes_accessed=int(n_pad * in_pad * 2 + n_pad * out_pad * 4 + weight_bytes),
        )

        kernel = functools.partial(_fused_mlp_kernel, num_blocks, h_pads)
        call = pl.pallas_call(
            kernel,
            out_shape=jax.ShapeDtypeStruct((n_pad, out_pad), jnp.float32),
            grid=grid,
            in_specs=[x_spec] + w_specs,
            out_specs=out_spec,
            compiler_params=pltpu.CompilerParams(
                dimension_semantics=("parallel",),   # batch tiles shard across TCs (megacore)
                vmem_limit_bytes=vmem_limit),
            cost_estimate=cost,
        )

        @jax.jit
        def fwd(x):
            x_p = (jnp.zeros((n_pad, in_pad), jnp.bfloat16)
                   .at[:n, :input_size].set(x.astype(jnp.bfloat16)))
            y_p = call(x_p, *flat)
            return y_p[:n, :out_size]

        return fwd

    cache = {}

    def forward(x):
        assert x.ndim == 2 and x.shape[1] == input_size
        n = x.shape[0]
        fn = cache.get(n)
        if fn is not None:
            return fn(x)
        last_err = None
        # Prefer single-buffered weight specs; fall back to default double-buffering if the
        # installed Pallas rejects pipeline_mode=Buffered(1).
        for single_buffer in (True, False):
            try:
                fn = build(n, single_buffer)
                y = jax.block_until_ready(fn(x))
                cache[n] = fn
                return y
            except Exception as e:  # noqa: BLE001 - fall back, re-raise if both variants fail
                last_err = e
        raise last_err

    return forward


# ----------------------------- parameter construction -----------------------------

def init_params(key, input_size, output_size, hidden_sizes):
    """Deterministic synthetic parameters mirroring the PyTorch module's shapes."""
    params = []
    prev = input_size
    for hidden in hidden_sizes:
        key, k1, k2, k3, k4, k5, k6 = jax.random.split(key, 7)
        two_h = hidden * 2
        bound = 1.0 / jnp.sqrt(prev)
        w = jax.random.uniform(k1, (prev, two_h), jnp.float32, -bound, bound)
        b = jax.random.uniform(k2, (two_h,), jnp.float32, -bound, bound)
        gamma = 1.0 + 0.1 * jax.random.normal(k3, (two_h,), jnp.float32)
        beta = 0.1 * jax.random.normal(k4, (two_h,), jnp.float32)
        running_mean = 0.1 * jax.random.normal(k5, (two_h,), jnp.float32)
        running_var = 1.0 + 0.1 * jnp.abs(jax.random.normal(k6, (two_h,), jnp.float32))
        params.append(dict(w=w, b=b, gamma=gamma, beta=beta,
                           mean=running_mean, var=running_var))
        prev = hidden
    key, k1, k2 = jax.random.split(key, 3)
    bound = 1.0 / jnp.sqrt(prev)
    w_out = jax.random.uniform(k1, (prev, output_size), jnp.float32, -bound, bound)
    b_out = jax.random.uniform(k2, (output_size,), jnp.float32, -bound, bound)
    return params, (w_out, b_out)


def reference_forward(x, block_params, out_params):
    """Pure-JAX f32 reference mirroring the PyTorch eval-mode forward (unfolded BN)."""
    for p in block_params:
        z = x @ p["w"] + p["b"]
        z = (z - p["mean"]) / jnp.sqrt(p["var"] + BN_EPS) * p["gamma"] + p["beta"]
        h = z.shape[1] // 2
        x = z[:, :h] * jax.nn.sigmoid(z[:, h:])
    w_out, b_out = out_params
    return x @ w_out + b_out


if __name__ == "__main__":
    key = jax.random.PRNGKey(0)
    key, kx, kp = jax.random.split(key, 3)

    batch = 8
    input_size = 16
    hidden_sizes = [32, 16]
    output_size = 4

    x = jax.random.normal(kx, (batch, input_size), jnp.float32)
    block_params, out_params = init_params(kp, input_size, output_size, hidden_sizes)

    forward = make_temporalnet_forward(block_params, out_params, input_size)
    y = jax.block_until_ready(forward(x))

    y_ref = reference_forward(x, block_params, out_params)
    assert y.shape == (batch, output_size)
    max_err = float(jnp.max(jnp.abs(y - y_ref)))
    # bf16 weights/activations (f32 accumulation) -> loosened tolerance vs f32 reference.
    assert jnp.allclose(y, y_ref, atol=3e-2, rtol=3e-2), f"mismatch vs reference (max abs err {max_err})"

    print("KERNEL_OK")
</pallas_src>

<mosaic_0001>
module attributes {stable_mosaic.version = 11 : i64} {
  func.func @_fused_mlp_kernel(%arg0: i32, %arg1: memref<16x128xbf16, #tpu.memory_space<vmem>>, %arg2: memref<128x256xbf16, #tpu.memory_space<vmem>>, %arg3: memref<1x256xf32, #tpu.memory_space<vmem>>, %arg4: memref<128x256xbf16, #tpu.memory_space<vmem>>, %arg5: memref<1x256xf32, #tpu.memory_space<vmem>>, %arg6: memref<128x128xbf16, #tpu.memory_space<vmem>>, %arg7: memref<1x128xf32, #tpu.memory_space<vmem>>, %arg8: memref<16x128xf32, #tpu.memory_space<vmem>>) attributes {dimension_semantics = [#tpu.dimension_semantics<parallel>], iteration_bounds = array<i64: 2>, scalar_prefetch = 0 : i64, scratch_operands = 0 : i64, tpu.core_type = #tpu.core_type<tc>, window_params = [{transform_indices = @transform_0, window_bounds = array<i64: 16, 128>}, {pipeline_mode = #tpu.pipeline_mode<synchronous>, transform_indices = @transform_1, window_bounds = array<i64: 128, 256>}, {pipeline_mode = #tpu.pipeline_mode<synchronous>, transform_indices = @transform_2, window_bounds = array<i64: 1, 256>}, {pipeline_mode = #tpu.pipeline_mode<synchronous>, transform_indices = @transform_3, window_bounds = array<i64: 128, 256>}, {pipeline_mode = #tpu.pipeline_mode<synchronous>, transform_indices = @transform_4, window_bounds = array<i64: 1, 256>}, {pipeline_mode = #tpu.pipeline_mode<synchronous>, transform_indices = @transform_5, window_bounds = array<i64: 128, 128>}, {pipeline_mode = #tpu.pipeline_mode<synchronous>, transform_indices = @transform_6, window_bounds = array<i64: 1, 128>}, {transform_indices = @transform_7, window_bounds = array<i64: 16, 128>}]} {
    %c0 = arith.constant 0 : index
    %c0_0 = arith.constant 0 : index
    %0 = vector.load %arg1[%c0, %c0_0] : memref<16x128xbf16, #tpu.memory_space<vmem>>, vector<16x128xbf16>
    %c0_1 = arith.constant 0 : index
    %c0_2 = arith.constant 0 : index
    %1 = vector.load %arg2[%c0_1, %c0_2] : memref<128x256xbf16, #tpu.memory_space<vmem>>, vector<128x256xbf16>
    %cst = arith.constant dense<0.000000e+00> : vector<16x256xf32>
    %2 = tpu.matmul %0, %1, %cst {dimension_numbers = #tpu.dot_dimension_numbers<[1], [0], [0], [1], [0, 0, 1, 1], [], []>} : vector<16x128xbf16>, vector<128x256xbf16>, vector<16x256xf32> -> vector<16x256xf32>
    %c0_3 = arith.constant 0 : index
    %c0_4 = arith.constant 0 : index
    %3 = vector.load %arg3[%c0_3, %c0_4] : memref<1x256xf32, #tpu.memory_space<vmem>>, vector<1x256xf32>
    %4 = vector.broadcast %3 : vector<1x256xf32> to vector<16x256xf32>
    %5 = arith.addf %2, %4 : vector<16x256xf32>
    %6 = vector.extract_strided_slice %5 {offsets = [0, 0], sizes = [16, 128], strides = [1, 1]} : vector<16x256xf32> to vector<16x128xf32>
    %7 = vector.extract_strided_slice %5 {offsets = [0, 128], sizes = [16, 128], strides = [1, 1]} : vector<16x256xf32> to vector<16x128xf32>
    %8 = arith.negf %7 : vector<16x128xf32>
    %9 = math.exp %8 : vector<16x128xf32>
    %cst_5 = arith.constant 1.000000e+00 : f32
    %10 = vector.broadcast %cst_5 : f32 to vector<16x128xf32>
    %11 = arith.addf %10, %9 : vector<16x128xf32>
    %12 = arith.divf %10, %11 : vector<16x128xf32>
    %13 = arith.mulf %6, %12 : vector<16x128xf32>
    %14 = arith.truncf %13 : vector<16x128xf32> to vector<16x128xbf16>
    %c0_6 = arith.constant 0 : index
    %c0_7 = arith.constant 0 : index
    %15 = vector.load %arg4[%c0_6, %c0_7] : memref<128x256xbf16, #tpu.memory_space<vmem>>, vector<128x256xbf16>
    %cst_8 = arith.constant dense<0.000000e+00> : vector<16x256xf32>
    %16 = tpu.matmul %14, %15, %cst_8 {dimension_numbers = #tpu.dot_dimension_numbers<[1], [0], [0], [1], [0, 0, 1, 1], [], []>} : vector<16x128xbf16>, vector<128x256xbf16>, vector<16x256xf32> -> vector<16x256xf32>
    %c0_9 = arith.constant 0 : index
    %c0_10 = arith.constant 0 : index
    %17 = vector.load %arg5[%c0_9, %c0_10] : memref<1x256xf32, #tpu.memory_space<vmem>>, vector<1x256xf32>
    %18 = vector.broadcast %17 : vector<1x256xf32> to vector<16x256xf32>
    %19 = arith.addf %16, %18 : vector<16x256xf32>
    %20 = vector.extract_strided_slice %19 {offsets = [0, 0], sizes = [16, 128], strides = [1, 1]} : vector<16x256xf32> to vector<16x128xf32>
    %21 = vector.extract_strided_slice %19 {offsets = [0, 128], sizes = [16, 128], strides = [1, 1]} : vector<16x256xf32> to vector<16x128xf32>
    %22 = arith.negf %21 : vector<16x128xf32>
    %23 = math.exp %22 : vector<16x128xf32>
    %cst_11 = arith.constant 1.000000e+00 : f32
    %24 = vector.broadcast %cst_11 : f32 to vector<16x128xf32>
    %25 = arith.addf %24, %23 : vector<16x128xf32>
    %26 = arith.divf %24, %25 : vector<16x128xf32>
    %27 = arith.mulf %20, %26 : vector<16x128xf32>
    %28 = arith.truncf %27 : vector<16x128xf32> to vector<16x128xbf16>
    %c0_12 = arith.constant 0 : index
    %c0_13 = arith.constant 0 : index
    %29 = vector.load %arg6[%c0_12, %c0_13] : memref<128x128xbf16, #tpu.memory_space<vmem>>, vector<128x128xbf16>
    %cst_14 = arith.constant dense<0.000000e+00> : vector<16x128xf32>
    %30 = tpu.matmul %28, %29, %cst_14 {dimension_numbers = #tpu.dot_dimension_numbers<[1], [0], [0], [1], [0, 0, 1, 1], [], []>} : vector<16x128xbf16>, vector<128x128xbf16>, vector<16x128xf32> -> vector<16x128xf32>
    %c0_15 = arith.constant 0 : index
    %c0_16 = arith.constant 0 : index
    %31 = vector.load %arg7[%c0_15, %c0_16] : memref<1x128xf32, #tpu.memory_space<vmem>>, vector<1x128xf32>
    %32 = vector.broadcast %31 : vector<1x128xf32> to vector<16x128xf32>
    %33 = arith.addf %30, %32 : vector<16x128xf32>
    %c0_17 = arith.constant 0 : index
    %c0_18 = arith.constant 0 : index
    %34 = vector.load %arg8[%c0_17, %c0_18] : memref<16x128xf32, #tpu.memory_space<vmem>>, vector<16x128xf32>
    tpu.vector_store %arg8[%c0_17, %c0_18], %33 {strides = array<i32>} : memref<16x128xf32, #tpu.memory_space<vmem>>, vector<16x128xf32>,
    return
  }
  func.func @transform_0(%arg0: i32) -> (i32, i32) {
    %c0_i32 = arith.constant 0 : i32
    %c0_i32_0 = arith.constant 0 : i32
    return %arg0, %c0_i32 : i32, i32
  }
  func.func @transform_1(%arg0: i32) -> (i32, i32) {
    %c0_i32 = arith.constant 0 : i32
    %c0_i32_0 = arith.constant 0 : i32
    %c0_i32_1 = arith.constant 0 : i32
    return %c0_i32, %c0_i32_0 : i32, i32
  }
  func.func @transform_2(%arg0: i32) -> (i32, i32) {
    %c0_i32 = arith.constant 0 : i32
    %c0_i32_0 = arith.constant 0 : i32
    %c0_i32_1 = arith.constant 0 : i32
    return %c0_i32, %c0_i32_0 : i32, i32
  }
  func.func @transform_3(%arg0: i32) -> (i32, i32) {
    %c0_i32 = arith.constant 0 : i32
    %c0_i32_0 = arith.constant 0 : i32
    %c0_i32_1 = arith.constant 0 : i32
    return %c0_i32, %c0_i32_0 : i32, i32
  }
  func.func @transform_4(%arg0: i32) -> (i32, i32) {
    %c0_i32 = arith.constant 0 : i32
    %c0_i32_0 = arith.constant 0 : i32
    %c0_i32_1 = arith.constant 0 : i32
    return %c0_i32, %c0_i32_0 : i32, i32
  }
  func.func @transform_5(%arg0: i32) -> (i32, i32) {
    %c0_i32 = arith.constant 0 : i32
    %c0_i32_0 = arith.constant 0 : i32
    %c0_i32_1 = arith.constant 0 : i32
    return %c0_i32, %c0_i32_0 : i32, i32
  }
  func.func @transform_6(%arg0: i32) -> (i32, i32) {
    %c0_i32 = arith.constant 0 : i32
    %c0_i32_0 = arith.constant 0 : i32
    %c0_i32_1 = arith.constant 0 : i32
    return %c0_i32, %c0_i32_0 : i32, i32
  }
  func.func @transform_7(%arg0: i32) -> (i32, i32) {
    %c0_i32 = arith.constant 0 : i32
    %c0_i32_0 = arith.constant 0 : i32
    return %arg0, %c0_i32 : i32, i32
  }
}

module attributes {stable_mosaic.version = 11 : i64} {
  func.func @_fused_mlp_kernel(%arg0: i32, %arg1: memref<16x128xbf16, #tpu.memory_space<vmem>>, %arg2: memref<128x256xbf16, #tpu.memory_space<vmem>>, %arg3: memref<1x256xf32, #tpu.memory_space<vmem>>, %arg4: memref<128x256xbf16, #tpu.memory_space<vmem>>, %arg5: memref<1x256xf32, #tpu.memory_space<vmem>>, %arg6: memref<128x128xbf16, #tpu.memory_space<vmem>>, %arg7: memref<1x128xf32, #tpu.memory_space<vmem>>, %arg8: memref<16x128xf32, #tpu.memory_space<vmem>>) attributes {dimension_semantics = [#tpu.dimension_semantics<parallel>], iteration_bounds = array<i64: 2>, scalar_prefetch = 0 : i64, scratch_operands = 0 : i64, tpu.core_type = #tpu.core_type<tc>, window_params = [{transform_indices = @transform_0, window_bounds = array<i64: 16, 128>}, {pipeline_mode = #tpu.pipeline_mode<synchronous>, transform_indices = @transform_1, window_bounds = array<i64: 128, 256>}, {pipeline_mode = #tpu.pipeline_mode<synchronous>, transform_indices = @transform_2, window_bounds = array<i64: 1, 256>}, {pipeline_mode = #tpu.pipeline_mode<synchronous>, transform_indices = @transform_3, window_bounds = array<i64: 128, 256>}, {pipeline_mode = #tpu.pipeline_mode<synchronous>, transform_indices = @transform_4, window_bounds = array<i64: 1, 256>}, {pipeline_mode = #tpu.pipeline_mode<synchronous>, transform_indices = @transform_5, window_bounds = array<i64: 128, 128>}, {pipeline_mode = #tpu.pipeline_mode<synchronous>, transform_indices = @transform_6, window_bounds = array<i64: 1, 128>}, {transform_indices = @transform_7, window_bounds = array<i64: 16, 128>}]} {
    %c0 = arith.constant 0 : index
    %c0_0 = arith.constant 0 : index
    %0 = vector.load %arg1[%c0, %c0_0] : memref<16x128xbf16, #tpu.memory_space<vmem>>, vector<16x128xbf16>
    %c0_1 = arith.constant 0 : index
    %c0_2 = arith.constant 0 : index
    %1 = vector.load %arg2[%c0_1, %c0_2] : memref<128x256xbf16, #tpu.memory_space<vmem>>, vector<128x256xbf16>
    %cst = arith.constant dense<0.000000e+00> : vector<16x256xf32>
    %2 = tpu.matmul %0, %1, %cst {dimension_numbers = #tpu.dot_dimension_numbers<[1], [0], [0], [1], [0, 0, 1, 1], [], []>} : vector<16x128xbf16>, vector<128x256xbf16>, vector<16x256xf32> -> vector<16x256xf32>
    %c0_3 = arith.constant 0 : index
    %c0_4 = arith.constant 0 : index
    %3 = vector.load %arg3[%c0_3, %c0_4] : memref<1x256xf32, #tpu.memory_space<vmem>>, vector<1x256xf32>
    %4 = vector.broadcast %3 : vector<1x256xf32> to vector<16x256xf32>
    %5 = arith.addf %2, %4 : vector<16x256xf32>
    %6 = vector.extract_strided_slice %5 {offsets = [0, 0], sizes = [16, 128], strides = [1, 1]} : vector<16x256xf32> to vector<16x128xf32>
    %7 = vector.extract_strided_slice %5 {offsets = [0, 128], sizes = [16, 128], strides = [1, 1]} : vector<16x256xf32> to vector<16x128xf32>
    %8 = arith.negf %7 : vector<16x128xf32>
    %9 = math.exp %8 : vector<16x128xf32>
    %cst_5 = arith.constant 1.000000e+00 : f32
    %10 = vector.broadcast %cst_5 : f32 to vector<16x128xf32>
    %11 = arith.addf %10, %9 : vector<16x128xf32>
    %12 = arith.divf %10, %11 : vector<16x128xf32>
    %13 = arith.mulf %6, %12 : vector<16x128xf32>
    %14 = arith.truncf %13 : vector<16x128xf32> to vector<16x128xbf16>
    %c0_6 = arith.constant 0 : index
    %c0_7 = arith.constant 0 : index
    %15 = vector.load %arg4[%c0_6, %c0_7] : memref<128x256xbf16, #tpu.memory_space<vmem>>, vector<128x256xbf16>
    %cst_8 = arith.constant dense<0.000000e+00> : vector<16x256xf32>
    %16 = tpu.matmul %14, %15, %cst_8 {dimension_numbers = #tpu.dot_dimension_numbers<[1], [0], [0], [1], [0, 0, 1, 1], [], []>} : vector<16x128xbf16>, vector<128x256xbf16>, vector<16x256xf32> -> vector<16x256xf32>
    %c0_9 = arith.constant 0 : index
    %c0_10 = arith.constant 0 : index
    %17 = vector.load %arg5[%c0_9, %c0_10] : memref<1x256xf32, #tpu.memory_space<vmem>>, vector<1x256xf32>
    %18 = vector.broadcast %17 : vector<1x256xf32> to vector<16x256xf32>
    %19 = arith.addf %16, %18 : vector<16x256xf32>
    %20 = vector.extract_strided_slice %19 {offsets = [0, 0], sizes = [16, 128], strides = [1, 1]} : vector<16x256xf32> to vector<16x128xf32>
    %21 = vector.extract_strided_slice %19 {offsets = [0, 128], sizes = [16, 128], strides = [1, 1]} : vector<16x256xf32> to vector<16x128xf32>
    %22 = arith.negf %21 : vector<16x128xf32>
    %23 = math.exp %22 : vector<16x128xf32>
    %cst_11 = arith.constant 1.000000e+00 : f32
    %24 = vector.broadcast %cst_11 : f32 to vector<16x128xf32>
    %25 = arith.addf %24, %23 : vector<16x128xf32>
    %26 = arith.divf %24, %25 : vector<16x128xf32>
    %27 = arith.mulf %20, %26 : vector<16x128xf32>
    %28 = arith.truncf %27 : vector<16x128xf32> to vector<16x128xbf16>
    %c0_12 = arith.constant 0 : index
    %c0_13 = arith.constant 0 : index
    %29 = vector.load %arg6[%c0_12, %c0_13] : memref<128x128xbf16, #tpu.memory_space<vmem>>, vector<128x128xbf16>
    %cst_14 = arith.constant dense<0.000000e+00> : vector<16x128xf32>
    %30 = tpu.matmul %28, %29, %cst_14 {dimension_numbers = #tpu.dot_dimension_numbers<[1], [0], [0], [1], [0, 0, 1, 1], [], []>} : vector<16x128xbf16>, vector<128x128xbf16>, vector<16x128xf32> -> vector<16x128xf32>
    %c0_15 = arith.constant 0 : index
    %c0_16 = arith.constant 0 : index
    %31 = vector.load %arg7[%c0_15, %c0_16] : memref<1x128xf32, #tpu.memory_space<vmem>>, vector<1x128xf32>
    %32 = vector.broadcast %31 : vector<1x128xf32> to vector<16x128xf32>
    %33 = arith.addf %30, %32 : vector<16x128xf32>
    %c0_17 = arith.constant 0 : index
    %c0_18 = arith.constant 0 : index
    %34 = vector.load %arg8[%c0_17, %c0_18] : memref<16x128xf32, #tpu.memory_space<vmem>>, vector<16x128xf32>
    tpu.vector_store %arg8[%c0_17, %c0_18], %33 {strides = array<i32>} : memref<16x128xf32, #tpu.memory_space<vmem>>, vector<16x128xf32>,
    return
  }
  func.func @transform_0(%arg0: i32) -> (i32, i32) {
    %c0_i32 = arith.constant 0 : i32
    %c0_i32_0 = arith.constant 0 : i32
    return %arg0, %c0_i32 : i32, i32
  }
  func.func @transform_1(%arg0: i32) -> (i32, i32) {
    %c0_i32 = arith.constant 0 : i32
    %c0_i32_0 = arith.constant 0 : i32
    %c0_i32_1 = arith.constant 0 : i32
    return %c0_i32, %c0_i32_0 : i32, i32
  }
  func.func @transform_2(%arg0: i32) -> (i32, i32) {
    %c0_i32 = arith.constant 0 : i32
    %c0_i32_0 = arith.constant 0 : i32
    %c0_i32_1 = arith.constant 0 : i32
    return %c0_i32, %c0_i32_0 : i32, i32
  }
  func.func @transform_3(%arg0: i32) -> (i32, i32) {
    %c0_i32 = arith.constant 0 : i32
    %c0_i32_0 = arith.constant 0 : i32
    %c0_i32_1 = arith.constant 0 : i32
    return %c0_i32, %c0_i32_0 : i32, i32
  }
  func.func @transform_4(%arg0: i32) -> (i32, i32) {
    %c0_i32 = arith.constant 0 : i32
    %c0_i32_0 = arith.constant 0 : i32
    %c0_i32_1 = arith.constant 0 : i32
    return %c0_i32, %c0_i32_0 : i32, i32
  }
  func.func @transform_5(%arg0: i32) -> (i32, i32) {
    %c0_i32 = arith.constant 0 : i32
    %c0_i32_0 = arith.constant 0 : i32
    %c0_i32_1 = arith.constant 0 : i32
    return %c0_i32, %c0_i32_0 : i32, i32
  }
  func.func @transform_6(%arg0: i32) -> (i32, i32) {
    %c0_i32 = arith.constant 0 : i32
    %c0_i32_0 = arith.constant 0 : i32
    %c0_i32_1 = arith.constant 0 : i32
    return %c0_i32, %c0_i32_0 : i32, i32
  }
  func.func @transform_7(%arg0: i32) -> (i32, i32) {
    %c0_i32 = arith.constant 0 : i32
    %c0_i32_0 = arith.constant 0 : i32
    return %arg0, %c0_i32 : i32, i32
  }
}

</mosaic_0001>

<llo_original>
// kernel: fwd.1
$region0: #{fwd.1}
  #allocation0 [shape = 'u32[]', space=smem, size = 0x4, offset = 0x4, fixed_abs, tag = 'smem constant byte address 0x4 - core index']
  #allocation1 [shape = 'u32[144,128]{1,0:T(1,128)}', space=vmem, size = 0x12000, scoped, tag = 'internal scratch']
  %s0 = inlined_call_operand.vmem [shape: bf16[32,128], index: 0, kind: input, shape index: {}]
  %s1 = inlined_call_operand.vmem [shape: bf16[128,256], index: 1, kind: input, shape index: {}]
  %s2 = inlined_call_operand.vmem [shape: f32[1,256], index: 2, kind: input, shape index: {}]
  %s3 = inlined_call_operand.vmem [shape: bf16[128,256], index: 3, kind: input, shape index: {}]
  %s4 = inlined_call_operand.vmem [shape: f32[1,256], index: 4, kind: input, shape index: {}]
  %s5 = inlined_call_operand.vmem [shape: bf16[128,128], index: 5, kind: input, shape index: {}]
  %s6 = inlined_call_operand.vmem [shape: f32[1,128], index: 6, kind: input, shape index: {}]
  %s7 = inlined_call_operand.vmem [shape: f32[32,128], index: 7, kind: output, shape index: {}]
  %s8 = sld [smem:[#allocation0]]
  $region61: #{fwd.1} parent=0
    _
  %s10 = ssub.s32 1, %s8
  %s11 = scalar_select 0, %s10, %s8
  loop: start=0, step=1, limit=4
  $region2: #{fwd.1} parent=0 // loop_pre_header
    _
  $region3: #{fwd.1} parent=0 // loop_header
    %s13 = sphi 0, %s17
    %p14 = scmp.ge.s32.totalorder %s13, 4
    %s23 = sphi 0, %s25
    %s26 = sphi 0, %s23
    %s27 = sphi 0, %s26
    %s43 = sphi 0, %s27
    %s47 = sphi 0, %s47
    %s49 = sphi 0, %s47
    %s50 = sphi 0, %s49
    %s64 = sphi 0, %s50
    %s68 = sphi 0, %s68
    %s70 = sphi 0, %s68
    %s71 = sphi 0, %s70
    %s85 = sphi 0, %s71
    %s89 = sphi 0, %s89
    %s91 = sphi 0, %s89
    %s92 = sphi 0, %s91
    %s106 = sphi 0, %s92
    %s110 = sphi 0, %s110
    %s112 = sphi 0, %s110
    %s113 = sphi 0, %s112
    %s127 = sphi 0, %s113
    %s131 = sphi 0, %s131
    %s133 = sphi 0, %s131
    %s134 = sphi 0, %s133
    %s148 = sphi 0, %s134
    %s152 = sphi 0, %s152
    %s154 = sphi 0, %s152
    %s155 = sphi 0, %s154
    %s169 = sphi 0, %s155
    %s175 = sphi 0, %s177
    %s178 = sphi 0, %s175
    %s179 = sphi 0, %s178
    %s195 = sphi 0, %s179
  $region4: #{fwd.1} parent=0 // loop_header_branch
    %16 = sbr.rel (%p14) target = $region8
  $region5: #{fwd.1} parent=0 // loop_body
    %s18 = ssub.s32 %s13, 1
    %s19 = ssub.s32 %s13, 2
    %s20 = sadd.s32 %s13, 1
    %s21 = ssub.s32 %s13, %s20
    %p22 = scmp.eq.s32.totalorder %s21, 0
    %s24 = sadd.s32 %s23, 1
    %s25 = scalar_select %p22, %s23, %s24
    %p28 = pneg %p22
    %p29 = scmp.eq.s32.totalorder %s13, 1
    %p30 = por %p28, %p29
    %p31 = scmp.ne.s32.totalorder %s23, %s26
    %p32 = scmp.eq.s32.totalorder %s13, 0
    %p33 = por %p31, %p32
    %p34 = scmp.ne.s32.totalorder %s23, %s26
    %p35 = scmp.eq.s32.totalorder %s18, 1
    %p36 = por %p34, %p35
    %p37 = scmp.ne.s32.totalorder %s26, %s27
    %p38 = scmp.eq.s32.totalorder %s18, 0
    %p39 = por %p37, %p38
    %p40 = scmp.ne.s32.totalorder %s26, %s27
    %p41 = scmp.eq.s32.totalorder %s19, 1
    %p42 = por %p40, %p41
    %p44 = scmp.ne.s32.totalorder %s27, %s43
    %p45 = scmp.eq.s32.totalorder %s19, 0
    %p46 = por %p44, %p45
    %s48 = sadd.s32 %s47, 1
    %p51 = scmp.eq.s32.totalorder %s13, 1
    %p52 = scmp.ne.s32.totalorder %s47, %s49
    %p53 = scmp.eq.s32.totalorder %s13, 0
    %p54 = por %p52, %p53
    %p55 = scmp.ne.s32.totalorder %s47, %s49
    %p56 = scmp.eq.s32.totalorder %s18, 1
    %p57 = por %p55, %p56
    %p58 = scmp.ne.s32.totalorder %s49, %s50
    %p59 = scmp.eq.s32.totalorder %s18, 0
    %p60 = por %p58, %p59
    %p61 = scmp.ne.s32.totalorder %s49, %s50
    %p62 = scmp.eq.s32.totalorder %s19, 1
    %p63 = por %p61, %p62
    %p65 = scmp.ne.s32.totalorder %s50, %s64
    %p66 = scmp.eq.s32.totalorder %s19, 0
    %p67 = por %p65, %p66
    %s69 = sadd.s32 %s68, 1
    %p72 = scmp.eq.s32.totalorder %s13, 1
    %p73 = scmp.ne.s32.totalorder %s68, %s70
    %p74 = scmp.eq.s32.totalorder %s13, 0
    %p75 = por %p73, %p74
    %p76 = scmp.ne.s32.totalorder %s68, %s70
    %p77 = scmp.eq.s32.totalorder %s18, 1
    %p78 = por %p76, %p77
    %p79 = scmp.ne.s32.totalorder %s70, %s71
    %p80 = scmp.eq.s32.totalorder %s18, 0
    %p81 = por %p79, %p80
    %p82 = scmp.ne.s32.totalorder %s70, %s71
    %p83 = scmp.eq.s32.totalorder %s19, 1
    %p84 = por %p82, %p83
    %p86 = scmp.ne.s32.totalorder %s71, %s85
    %p87 = scmp.eq.s32.totalorder %s19, 0
    %p88 = por %p86, %p87
    %s90 = sadd.s32 %s89, 1
    %p93 = scmp.eq.s32.totalorder %s13, 1
    %p94 = scmp.ne.s32.totalorder %s89, %s91
    %p95 = scmp.eq.s32.totalorder %s13, 0
    %p96 = por %p94, %p95
    %p97 = scmp.ne.s32.totalorder %s89, %s91
    %p98 = scmp.eq.s32.totalorder %s18, 1
    %p99 = por %p97, %p98
    %p100 = scmp.ne.s32.totalorder %s91, %s92
    %p101 = scmp.eq.s32.totalorder %s18, 0
    %p102 = por %p100, %p101
    %p103 = scmp.ne.s32.totalorder %s91, %s92
    %p104 = scmp.eq.s32.totalorder %s19, 1
    %p105 = por %p103, %p104
    %p107 = scmp.ne.s32.totalorder %s92, %s106
    %p108 = scmp.eq.s32.totalorder %s19, 0
    %p109 = por %p107, %p108
    %s111 = sadd.s32 %s110, 1
    %p114 = scmp.eq.s32.totalorder %s13, 1
    %p115 = scmp.ne.s32.totalorder %s110, %s112
    %p116 = scmp.eq.s32.totalorder %s13, 0
    %p117 = por %p115, %p116
    %p118 = scmp.ne.s32.totalorder %s110, %s112
    %p119 = scmp.eq.s32.totalorder %s18, 1
    %p120 = por %p118, %p119
    %p121 = scmp.ne.s32.totalorder %s112, %s113
    %p122 = scmp.eq.s32.totalorder %s18, 0
    %p123 = por %p121, %p122
    %p124 = scmp.ne.s32.totalorder %s112, %s113
    %p125 = scmp.eq.s32.totalorder %s19, 1
    %p126 = por %p124, %p125
    %p128 = scmp.ne.s32.totalorder %s113, %s127
    %p129 = scmp.eq.s32.totalorder %s19, 0
    %p130 = por %p128, %p129
    %s132 = sadd.s32 %s131, 1
    %p135 = scmp.eq.s32.totalorder %s13, 1
    %p136 = scmp.ne.s32.totalorder %s131, %s133
    %p137 = scmp.eq.s32.totalorder %s13, 0
    %p138 = por %p136, %p137
    %p139 = scmp.ne.s32.totalorder %s131, %s133
    %p140 = scmp.eq.s32.totalorder %s18, 1
    %p141 = por %p139, %p140
    %p142 = scmp.ne.s32.totalorder %s133, %s134
    %p143 = scmp.eq.s32.totalorder %s18, 0
    %p144 = por %p142, %p143
    %p145 = scmp.ne.s32.totalorder %s133, %s134
    %p146 = scmp.eq.s32.totalorder %s19, 1
    %p147 = por %p145, %p146
    %p149 = scmp.ne.s32.totalorder %s134, %s148
    %p150 = scmp.eq.s32.totalorder %s19, 0
    %p151 = por %p149, %p150
    %s153 = sadd.s32 %s152, 1
    %p156 = scmp.eq.s32.totalorder %s13, 1
    %p157 = scmp.ne.s32.totalorder %s152, %s154
    %p158 = scmp.eq.s32.totalorder %s13, 0
    %p159 = por %p157, %p158
    %p160 = scmp.ne.s32.totalorder %s152, %s154
    %p161 = scmp.eq.s32.totalorder %s18, 1
    %p162 = por %p160, %p161
    %p163 = scmp.ne.s32.totalorder %s154, %s155
    %p164 = scmp.eq.s32.totalorder %s18, 0
    %p165 = por %p163, %p164
    %p166 = scmp.ne.s32.totalorder %s154, %s155
    %p167 = scmp.eq.s32.totalorder %s19, 1
    %p168 = por %p166, %p167
    %p170 = scmp.ne.s32.totalorder %s155, %s169
    %p171 = scmp.eq.s32.totalorder %s19, 0
    %p172 = por %p170, %p171
    %s173 = ssub.s32 %s13, %s20
    %p174 = scmp.eq.s32.totalorder %s173, 0
    %s176 = sadd.s32 %s175, 1
    %s177 = scalar_select %p174, %s175, %s176
    %p180 = pneg %p174
    %p181 = scmp.eq.s32.totalorder %s13, 1
    %p182 = por %p180, %p181
    %p183 = scmp.ne.s32.totalorder %s175, %s178
    %p184 = scmp.eq.s32.totalorder %s13, 0
    %p185 = por %p183, %p184
    %p186 = scmp.ne.s32.totalorder %s175, %s178
    %p187 = scmp.eq.s32.totalorder %s18, 1
    %p188 = por %p186, %p187
    %p189 = scmp.ne.s32.totalorder %s178, %s179
    %p190 = scmp.eq.s32.totalorder %s18, 0
    %p191 = por %p189, %p190
    %p192 = scmp.ne.s32.totalorder %s178, %s179
    %p193 = scmp.eq.s32.totalorder %s19, 1
    %p194 = por %p192, %p193
    %p196 = scmp.ne.s32.totalorder %s179, %s195
    %p197 = scmp.eq.s32.totalorder %s19, 0
    %p198 = por %p196, %p197
    %p199 = scmp.le.s32.totalorder 1, %s13
    %p200 = scmp.lt.s32.totalorder %s13, 3
    %p201 = pnand %p199, %p200
    %p202 = pneg %p201
    // Predicated region
    $region9: #{fwd.1} parent=5 // pred_check
      _
    $region10: #{fwd.1} parent=5 // pred_check_branch
      %204 = sbr.rel (%p201) target = $region12
    $region11: #{fwd.1} parent=5 // pred_region
      %s205 = ssub.s32 %s13, 1
      // Predicated region
      $region13: #{fwd.1} parent=11 // pred_check
        %p206 = pneg %p60
      $region14: #{fwd.1} parent=11 // pred_check_branch
        %208 = sbr.rel (%p206) target = $region16
      $region15: #{fwd.1} parent=11 // pred_region
        _
      $region16: #{fwd.1} parent=11 // pred_fallthru
        _
      // Predicated region
      $region17: #{fwd.1} parent=11 // pred_check
        %p209 = pneg %p81
      $region18: #{fwd.1} parent=11 // pred_check_branch
        %211 = sbr.rel (%p209) target = $region20
      $region19: #{fwd.1} parent=11 // pred_region
        _
      $region20: #{fwd.1} parent=11 // pred_fallthru
        _
      // Predicated region
      $region21: #{fwd.1} parent=11 // pred_check
        %p212 = pneg %p102
      $region22: #{fwd.1} parent=11 // pred_check_branch
        %214 = sbr.rel (%p212) target = $region24
      $region23: #{fwd.1} parent=11 // pred_region
        _
      $region24: #{fwd.1} parent=11 // pred_fallthru
        _
      // Predicated region
      $region25: #{fwd.1} parent=11 // pred_check
        %p215 = pneg %p123
      $region26: #{fwd.1} parent=11 // pred_check_branch
        %217 = sbr.rel (%p215) target = $region28
      $region27: #{fwd.1} parent=11 // pred_region
        _
      $region28: #{fwd.1} parent=11 // pred_fallthru
        _
      // Predicated region
      $region29: #{fwd.1} parent=11 // pred_check
        %p218 = pneg %p144
      $region30: #{fwd.1} parent=11 // pred_check_branch
        %220 = sbr.rel (%p218) target = $region32
      $region31: #{fwd.1} parent=11 // pred_region
        _
      $region32: #{fwd.1} parent=11 // pred_fallthru
        _
      // Predicated region
      $region33: #{fwd.1} parent=11 // pred_check
        %p221 = pneg %p165
      $region34: #{fwd.1} parent=11 // pred_check_branch
        %223 = sbr.rel (%p221) target = $region36
      $region35: #{fwd.1} parent=11 // pred_region
        _
      $region36: #{fwd.1} parent=11 // pred_fallthru
        _
    $region12: #{fwd.1} parent=5 // pred_fallthru
      _
    %p224 = scmp.lt.s32.totalorder %s13, 2
    // Predicated region
    $region37: #{fwd.1} parent=5 // pred_check
      %p225 = pneg %p224
    $region38: #{fwd.1} parent=5 // pred_check_branch
      %227 = sbr.rel (%p225) target = $region40
    $region39: #{fwd.1} parent=5 // pred_region
      // Predicated region
      $region41: #{fwd.1} parent=39 // pred_check
        %p228 = pneg %p33
      $region42: #{fwd.1} parent=39 // pred_check_branch
        %230 = sbr.rel (%p228) target = $region44
      $region43: #{fwd.1} parent=39 // pred_region
        %s231 = smul.u32 2, %s13
        %p232 = scmp.lt.s32.totalorder %s231, 3
        %s233 = scalar_select %p232, %s231, 3
        %s234 = smul.addr %s233, 4
        %s235 = scalar_lea.vmem %s0, %s234
        %s236 = smul.u32 2, %s13
      $region44: #{fwd.1} parent=39 // pred_fallthru
        _
    $region40: #{fwd.1} parent=5 // pred_fallthru
      _
    %p237 = scmp.le.s32.totalorder 1, %s13
    %p238 = scmp.lt.s32.totalorder %s13, 3
    %p239 = pnand %p237, %p238
    %p240 = pneg %p239
    // Predicated region
    $region45: #{fwd.1} parent=5 // pred_check
      _
    $region46: #{fwd.1} parent=5 // pred_check_branch
      %242 = sbr.rel (%p239) target = $region48
    $region47: #{fwd.1} parent=5 // pred_region
      %s243 = ssub.s32 %s13, 1
      %s244 = smul.u32 2, %s18
      %p245 = scmp.lt.s32.totalorder %s244, 3
      %s246 = scalar_select %p245, %s244, 3
      %s247 = smul.addr %s246, 4
      %s248 = scalar_lea.vmem %s0, %s247
      %p249 = pneg %p39
      %p250 = pneg %p36
      %p251 = pneg %p60
      %p252 = pneg %p57
      %p253 = pneg %p81
      %p254 = pneg %p78
      %p255 = pneg %p102
      %p256 = pneg %p99
      %p257 = pneg %p123
      %p258 = pneg %p120
      %p259 = pneg %p144
      %p260 = pneg %p141
      %p261 = pneg %p165
      %p262 = pneg %p162
      %p263 = pneg %p191
      %p264 = pneg %p188
      %s265 = smul.u32 2, %s18
      %p266 = scmp.lt.s32.totalorder %s265, 3
      %s267 = scalar_select %p266, %s265, 3
      %s268 = smul.addr %s267, 8
      %s269 = scalar_lea.vmem %s7, %s268
      %s270 = smul.u32 2, %s18
      %p271 = scmp.lt.s32.totalorder %s270, 3
      %s272 = scalar_select %p271, %s270, 3
      %s273 = smul.addr %s272, 4
      %s274 = scalar_lea.vmem %s0, %s273
      %s275 = smul.u32 2, %s18
      %s276 = smul.u32 2, %s18
      %p277 = scmp.lt.s32.totalorder %s276, 3
      %s278 = scalar_select %p277, %s276, 3
      %s279 = smul.addr %s278, 8
      %s280 = scalar_lea.vmem %s7, %s279
      %s281 = smul.u32 2, %s18
      %v283 = vld [vmem:[%s274] sm:$0xf]
      %v284 = vld [vmem:[%s274 + $0x4] sm:$0xf]
      %v285 = vld [vmem:[%s1] sm:$0xff]
      %v286 = vld [vmem:[%s1 + $0x8] sm:$0xff]
      %v287 = vld [vmem:[%s1 + $0x10] sm:$0xff]
      %v288 = vld [vmem:[%s1 + $0x18] sm:$0xff]
      %v289 = vld [vmem:[%s1 + $0x20] sm:$0xff]
      %v290 = vld [vmem:[%s1 + $0x28] sm:$0xff]
      %v291 = vld [vmem:[%s1 + $0x30] sm:$0xff]
      %v292 = vld [vmem:[%s1 + $0x38] sm:$0xff]
      %v293 = vld [vmem:[%s1 + $0x40] sm:$0xff]
      %v294 = vld [vmem:[%s1 + $0x48] sm:$0xff]
      %v295 = vld [vmem:[%s1 + $0x50] sm:$0xff]
      %v296 = vld [vmem:[%s1 + $0x58] sm:$0xff]
      %v297 = vld [vmem:[%s1 + $0x60] sm:$0xff]
      %v298 = vld [vmem:[%s1 + $0x68] sm:$0xff]
      %v299 = vld [vmem:[%s1 + $0x70] sm:$0xff]
      %v300 = vld [vmem:[%s1 + $0x78] sm:$0xff]
      %v301 = vld [vmem:[%s2] sm:$0x3]
      %v303 = vlaneseq
      %v304 = vshrl.u32 %v303, 7
      %v305 = vsub.s32 0, %v304
      %v306 = vrot.slane %v301, %v305
      %v307 = vlaneseq
      %v308 = vshrl.u32 %v307, 7
      %v309 = vsub.s32 1, %v308
      %v310 = vrot.slane %v301, %v309
      %v315 = vunpack.c.l.b16 %v283
      %v316 = vunpack.c.l.b16 %v284
      %v317 = vpack.c.b16 %v316, %v315
      %v335 = vunpack.c.l.b16 %v285
      %v336 = vunpack.c.h.b16 %v285
      %v337 = vunpack.c.l.b16 %v286
      %v338 = vunpack.c.h.b16 %v286
      %v339 = vunpack.c.l.b16 %v287
      %v340 = vunpack.c.h.b16 %v287
      %v341 = vunpack.c.l.b16 %v288
      %v342 = vunpack.c.h.b16 %v288
      %v343 = vunpack.c.l.b16 %v289
      %v344 = vunpack.c.h.b16 %v289
      %v345 = vunpack.c.l.b16 %v290
      %v346 = vunpack.c.h.b16 %v290
      %v347 = vunpack.c.l.b16 %v291
      %v348 = vunpack.c.h.b16 %v291
      %v349 = vunpack.c.l.b16 %v292
      %v350 = vunpack.c.h.b16 %v292
      %v351 = vunpack.c.l.b16 %v293
      %v352 = vunpack.c.h.b16 %v293
      %v353 = vunpack.c.l.b16 %v294
      %v354 = vunpack.c.h.b16 %v294
      %v355 = vunpack.c.l.b16 %v295
      %v356 = vunpack.c.h.b16 %v295
      %v357 = vunpack.c.l.b16 %v296
      %v358 = vunpack.c.h.b16 %v296
      %v359 = vunpack.c.l.b16 %v297
      %v360 = vunpack.c.h.b16 %v297
      %v361 = vunpack.c.l.b16 %v298
      %v362 = vunpack.c.h.b16 %v298
      %v363 = vunpack.c.l.b16 %v299
      %v364 = vunpack.c.h.b16 %v299
      %v365 = vunpack.c.l.b16 %v300
      %v366 = vunpack.c.h.b16 %v300
      %v367 = vpack.c.b16 %v337, %v335
      %v368 = vpack.c.b16 %v338, %v336
      %v369 = vpack.c.b16 %v341, %v339
      %v370 = vpack.c.b16 %v342, %v340
      %v371 = vpack.c.b16 %v345, %v343
      %v372 = vpack.c.b16 %v346, %v344
      %v373 = vpack.c.b16 %v349, %v347
      %v374 = vpack.c.b16 %v350, %v348
      %v375 = vpack.c.b16 %v353, %v351
      %v376 = vpack.c.b16 %v354, %v352
      %v377 = vpack.c.b16 %v357, %v355
      %v378 = vpack.c.b16 %v358, %v356
      %v379 = vpack.c.b16 %v361, %v359
      %v380 = vpack.c.b16 %v362, %v360
      %v381 = vpack.c.b16 %v365, %v363
      %v382 = vpack.c.b16 %v366, %v364
      %399 = vmatprep.subr.bf16.mxu0 %v368
      %400 = vmatpush1.bf16.msra.mxu0 %v367
      %401 = vmatprep.subr.bf16.mxu0 %v370
      %402 = vmatpush1.bf16.msra.mxu0 %v369
      %403 = vmatprep.subr.bf16.mxu0 %v372
      %404 = vmatpush1.bf16.msra.mxu0 %v371
      %405 = vmatprep.subr.bf16.mxu0 %v374
      %406 = vmatpush1.bf16.msra.mxu0 %v373
      %407 = vmatprep.subr.bf16.mxu0 %v376
      %408 = vmatpush1.bf16.msra.mxu0 %v375
      %409 = vmatprep.subr.bf16.mxu0 %v378
      %410 = vmatpush1.bf16.msra.mxu0 %v377
      %411 = vmatprep.subr.bf16.mxu0 %v380
      %412 = vmatpush1.bf16.msra.mxu0 %v379
      %413 = vmatprep.subr.bf16.mxu0 %v382
      %414 = vmatpush1.bf16.msra.mxu0 %v381
      %415 = vmatprep.subr.bf16.mxu0 0
      %416 = vmatpush1.bf16.msra.mxu0 0
      %417 = vmatprep.subr.bf16.mxu0 0
      %418 = vmatpush1.bf16.msra.mxu0 0
      %419 = vmatprep.subr.bf16.mxu0 0
      %420 = vmatpush1.bf16.msra.mxu0 0
      %421 = vmatprep.subr.bf16.mxu0 0
      %422 = vmatpush1.bf16.msra.mxu0 0
      %423 = vmatprep.subr.bf16.mxu0 0
      %424 = vmatpush1.bf16.msra.mxu0 0
      %425 = vmatprep.subr.bf16.mxu0 0
      %426 = vmatpush1.bf16.msra.mxu0 0
      %427 = vmatprep.subr.bf16.mxu0 0
      %428 = vmatpush1.bf16.msra.mxu0 0
      %429 = vmatprep.subr.bf16.mxu0 0
      %430 = vmatpush1.bf16.msra.mxu0 0
      %431 = vmatprep.mubr.bf16.mxu0 0
      %432 = vmatmul.mubr.bf16.gmra.mrb[0].mxu0 %v317
      %v433 = vpop.f32.mrb[0].mxu0
      %v434 = vadd.f32 %v306, %v433
      %v435 = vpop.f32.mrb[0].mxu0
      %v436 = vadd.f32 %v310, %v435
      %v437 = vpop.f32.mrb[0].mxu0
      %v438 = vadd.f32 %v306, %v437
      %v439 = vpop.f32.mrb[0].mxu0
      %v440 = vadd.f32 %v310, %v439
      %441 = vdwg.mxu0
      %v442 = vxor.u32 %v436, 2147483648
      %v443 = vxor.u32 %v440, 2147483648
      %v444 = vmul.f32 %v442, 1.442695
      %v445 = vpow.pop %v444
      %v446 = vmul.f32 %v443, 1.442695
      %v447 = vpow.pop %v446
      %v448 = vadd.f32 %v445, 1.0
      %v449 = vadd.f32 %v447, 1.0
      %v450 = vrcp.pop %v448
      %v451 = vmul.f32 1.0, %v450
      %v452 = vrcp.pop %v449
      %v453 = vmul.f32 1.0, %v452
      %v454 = vmul.f32 %v434, %v451
      %v455 = vmul.f32 %v438, %v453
      %v456 = vpack.c.bf16 %v455, %v454
      %v457 = vld [vmem:[%s3] sm:$0xff]
      %v458 = vld [vmem:[%s3 + $0x8] sm:$0xff]
      %v459 = vld [vmem:[%s3 + $0x10] sm:$0xff]
      %v460 = vld [vmem:[%s3 + $0x18] sm:$0xff]
      %v461 = vld [vmem:[%s3 + $0x20] sm:$0xff]
      %v462 = vld [vmem:[%s3 + $0x28] sm:$0xff]
      %v463 = vld [vmem:[%s3 + $0x30] sm:$0xff]
      %v464 = vld [vmem:[%s3 + $0x38] sm:$0xff]
      %v465 = vld [vmem:[%s3 + $0x40] sm:$0xff]
      %v466 = vld [vmem:[%s3 + $0x48] sm:$0xff]
      %v467 = vld [vmem:[%s3 + $0x50] sm:$0xff]
      %v468 = vld [vmem:[%s3 + $0x58] sm:$0xff]
      %v469 = vld [vmem:[%s3 + $0x60] sm:$0xff]
      %v470 = vld [vmem:[%s3 + $0x68] sm:$0xff]
      %v471 = vld [vmem:[%s3 + $0x70] sm:$0xff]
      %v472 = vld [vmem:[%s3 + $0x78] sm:$0xff]
      %v473 = vld [vmem:[%s4] sm:$0x3]
      %v475 = vlaneseq
      %v476 = vshrl.u32 %v475, 7
      %v477 = vsub.s32 0, %v476
      %v478 = vrot.slane %v473, %v477
      %v479 = vlaneseq
      %v480 = vshrl.u32 %v479, 7
      %v481 = vsub.s32 1, %v480
      %v482 = vrot.slane %v473, %v481
      %v501 = vunpack.c.l.b16 %v457
      %v502 = vunpack.c.h.b16 %v457
      %v503 = vunpack.c.l.b16 %v458
      %v504 = vunpack.c.h.b16 %v458
      %v505 = vunpack.c.l.b16 %v459
      %v506 = vunpack.c.h.b16 %v459
      %v507 = vunpack.c.l.b16 %v460
      %v508 = vunpack.c.h.b16 %v460
      %v509 = vunpack.c.l.b16 %v461
      %v510 = vunpack.c.h.b16 %v461
      %v511 = vunpack.c.l.b16 %v462
      %v512 = vunpack.c.h.b16 %v462
      %v513 = vunpack.c.l.b16 %v463
      %v514 = vunpack.c.h.b16 %v463
      %v515 = vunpack.c.l.b16 %v464
      %v516 = vunpack.c.h.b16 %v464
      %v517 = vunpack.c.l.b16 %v465
      %v518 = vunpack.c.h.b16 %v465
      %v519 = vunpack.c.l.b16 %v466
      %v520 = vunpack.c.h.b16 %v466
      %v521 = vunpack.c.l.b16 %v467
      %v522 = vunpack.c.h.b16 %v467
      %v523 = vunpack.c.l.b16 %v468
      %v524 = vunpack.c.h.b16 %v468
      %v525 = vunpack.c.l.b16 %v469
      %v526 = vunpack.c.h.b16 %v469
      %v527 = vunpack.c.l.b16 %v470
      %v528 = vunpack.c.h.b16 %v470
      %v529 = vunpack.c.l.b16 %v471
      %v530 = vunpack.c.h.b16 %v471
      %v531 = vunpack.c.l.b16 %v472
      %v532 = vunpack.c.h.b16 %v472
      %v533 = vpack.c.b16 %v503, %v501
      %v534 = vpack.c.b16 %v504, %v502
      %v535 = vpack.c.b16 %v507, %v505
      %v536 = vpack.c.b16 %v508, %v506
      %v537 = vpack.c.b16 %v511, %v509
      %v538 = vpack.c.b16 %v512, %v510
      %v539 = vpack.c.b16 %v515, %v513
      %v540 = vpack.c.b16 %v516, %v514
      %v541 = vpack.c.b16 %v519, %v517
      %v542 = vpack.c.b16 %v520, %v518
      %v543 = vpack.c.b16 %v523, %v521
      %v544 = vpack.c.b16 %v524, %v522
      %v545 = vpack.c.b16 %v527, %v525
      %v546 = vpack.c.b16 %v528, %v526
      %v547 = vpack.c.b16 %v531, %v529
      %v548 = vpack.c.b16 %v532, %v530
      %565 = vmatprep.subr.bf16.mxu0 %v534
      %566 = vmatpush1.bf16.msra.mxu0 %v533
      %567 = vmatprep.subr.bf16.mxu0 %v536
      %568 = vmatpush1.bf16.msra.mxu0 %v535
      %569 = vmatprep.subr.bf16.mxu0 %v538
      %570 = vmatpush1.bf16.msra.mxu0 %v537
      %571 = vmatprep.subr.bf16.mxu0 %v540
      %572 = vmatpush1.bf16.msra.mxu0 %v539
      %573 = vmatprep.subr.bf16.mxu0 %v542
      %574 = vmatpush1.bf16.msra.mxu0 %v541
      %575 = vmatprep.subr.bf16.mxu0 %v544
      %576 = vmatpush1.bf16.msra.mxu0 %v543
      %577 = vmatprep.subr.bf16.mxu0 %v546
      %578 = vmatpush1.bf16.msra.mxu0 %v545
      %579 = vmatprep.subr.bf16.mxu0 %v548
      %580 = vmatpush1.bf16.msra.mxu0 %v547
      %581 = vmatprep.subr.bf16.mxu0 0
      %582 = vmatpush1.bf16.msra.mxu0 0
      %583 = vmatprep.subr.bf16.mxu0 0
      %584 = vmatpush1.bf16.msra.mxu0 0
      %585 = vmatprep.subr.bf16.mxu0 0
      %586 = vmatpush1.bf16.msra.mxu0 0
      %587 = vmatprep.subr.bf16.mxu0 0
      %588 = vmatpush1.bf16.msra.mxu0 0
      %589 = vmatprep.subr.bf16.mxu0 0
      %590 = vmatpush1.bf16.msra.mxu0 0
      %591 = vmatprep.subr.bf16.mxu0 0
      %592 = vmatpush1.bf16.msra.mxu0 0
      %593 = vmatprep.subr.bf16.mxu0 0
      %594 = vmatpush1.bf16.msra.mxu0 0
      %595 = vmatprep.subr.bf16.mxu0 0
      %596 = vmatpush1.bf16.msra.mxu0 0
      %597 = vmatprep.mubr.bf16.mxu0 0
      %598 = vmatmul.mubr.bf16.gmra.mrb[0].mxu0 %v456
      %v599 = vpop.f32.mrb[0].mxu0
      %v600 = vadd.f32 %v478, %v599
      %v601 = vpop.f32.mrb[0].mxu0
      %v602 = vadd.f32 %v482, %v601
      %v603 = vpop.f32.mrb[0].mxu0
      %v604 = vadd.f32 %v478, %v603
      %v605 = vpop.f32.mrb[0].mxu0
      %v606 = vadd.f32 %v482, %v605
      %607 = vdwg.mxu0
      %v608 = vxor.u32 %v602, 2147483648
      %v609 = vxor.u32 %v606, 2147483648
      %v610 = vmul.f32 %v608, 1.442695
      %v611 = vpow.pop %v610
      %v612 = vmul.f32 %v609, 1.442695
      %v613 = vpow.pop %v612
      %v614 = vadd.f32 %v611, 1.0
      %v615 = vadd.f32 %v613, 1.0
      %v616 = vrcp.pop %v614
      %v617 = vmul.f32 1.0, %v616
      %v618 = vrcp.pop %v615
      %v619 = vmul.f32 1.0, %v618
      %v620 = vmul.f32 %v600, %v617
      %v621 = vmul.f32 %v604, %v619
      %v622 = vpack.c.bf16 %v621, %v620
      %v623 = vld [vmem:[%s5] sm:$0xf]
      %v624 = vld [vmem:[%s5 + $0x4] sm:$0xf]
      %v625 = vld [vmem:[%s5 + $0x8] sm:$0xf]
      %v626 = vld [vmem:[%s5 + $0xc] sm:$0xf]
      %v627 = vld [vmem:[%s5 + $0x10] sm:$0xf]
      %v628 = vld [vmem:[%s5 + $0x14] sm:$0xf]
      %v629 = vld [vmem:[%s5 + $0x18] sm:$0xf]
      %v630 = vld [vmem:[%s5 + $0x1c] sm:$0xf]
      %v631 = vld [vmem:[%s5 + $0x20] sm:$0xf]
      %v632 = vld [vmem:[%s5 + $0x24] sm:$0xf]
      %v633 = vld [vmem:[%s5 + $0x28] sm:$0xf]
      %v634 = vld [vmem:[%s5 + $0x2c] sm:$0xf]
      %v635 = vld [vmem:[%s5 + $0x30] sm:$0xf]
      %v636 = vld [vmem:[%s5 + $0x34] sm:$0xf]
      %v637 = vld [vmem:[%s5 + $0x38] sm:$0xf]
      %v638 = vld [vmem:[%s5 + $0x3c] sm:$0xf]
      %v639 = vld [vmem:[%s6] sm:$0x1]
      %v641 = vlaneseq
      %v642 = vshrl.u32 %v641, 7
      %v643 = vsub.s32 0, %v642
      %v644 = vrot.slane %v639, %v643
      %v662 = vunpack.c.l.b16 %v623
      %v663 = vunpack.c.l.b16 %v624
      %v664 = vunpack.c.l.b16 %v625
      %v665 = vunpack.c.l.b16 %v626
      %v666 = vunpack.c.l.b16 %v627
      %v667 = vunpack.c.l.b16 %v628
      %v668 = vunpack.c.l.b16 %v629
      %v669 = vunpack.c.l.b16 %v630
      %v670 = vunpack.c.l.b16 %v631
      %v671 = vunpack.c.l.b16 %v632
      %v672 = vunpack.c.l.b16 %v633
      %v673 = vunpack.c.l.b16 %v634
      %v674 = vunpack.c.l.b16 %v635
      %v675 = vunpack.c.l.b16 %v636
      %v676 = vunpack.c.l.b16 %v637
      %v677 = vunpack.c.l.b16 %v638
      %v678 = vpack.c.b16 %v663, %v662
      %v679 = vpack.c.b16 %v665, %v664
      %v680 = vpack.c.b16 %v667, %v666
      %v681 = vpack.c.b16 %v669, %v668
      %v682 = vpack.c.b16 %v671, %v670
      %v683 = vpack.c.b16 %v673, %v672
      %v684 = vpack.c.b16 %v675, %v674
      %v685 = vpack.c.b16 %v677, %v676
      %694 = vmatprep.subr.bf16.mxu0 0
      %695 = vmatpush1.bf16.msra.mxu0 %v678
      %696 = vmatprep.subr.bf16.mxu0 0
      %697 = vmatpush1.bf16.msra.mxu0 %v679
      %698 = vmatprep.subr.bf16.mxu0 0
      %699 = vmatpush1.bf16.msra.mxu0 %v680
      %700 = vmatprep.subr.bf16.mxu0 0
      %701 = vmatpush1.bf16.msra.mxu0 %v681
      %702 = vmatprep.subr.bf16.mxu0 0
      %703 = vmatpush1.bf16.msra.mxu0 %v682
      %704 = vmatprep.subr.bf16.mxu0 0
      %705 = vmatpush1.bf16.msra.mxu0 %v683
      %706 = vmatprep.subr.bf16.mxu0 0
      %707 = vmatpush1.bf16.msra.mxu0 %v684
      %708 = vmatprep.subr.bf16.mxu0 0
      %709 = vmatpush1.bf16.msra.mxu0 %v685
      %710 = vmatprep.subr.bf16.mxu0 0
      %711 = vmatpush1.bf16.msra.mxu0 0
      %712 = vmatprep.subr.bf16.mxu0 0
      %713 = vmatpush1.bf16.msra.mxu0 0
      %714 = vmatprep.subr.bf16.mxu0 0
      %715 = vmatpush1.bf16.msra.mxu0 0
      %716 = vmatprep.subr.bf16.mxu0 0
      %717 = vmatpush1.bf16.msra.mxu0 0
      %718 = vmatprep.subr.bf16.mxu0 0
      %719 = vmatpush1.bf16.msra.mxu0 0
      %720 = vmatprep.subr.bf16.mxu0 0
      %721 = vmatpush1.bf16.msra.mxu0 0
      %722 = vmatprep.subr.bf16.mxu0 0
      %723 = vmatpush1.bf16.msra.mxu0 0
      %724 = vmatprep.subr.bf16.mxu0 0
      %725 = vmatpush1.bf16.msra.mxu0 0
      %726 = vmatprep.mubr.bf16.mxu0 0
      %727 = vmatmul.mubr.bf16.gmra.mrb[0].mxu0 %v622
      %v728 = vpop.f32.mrb[0].mxu0
      %v729 = vadd.f32 %v644, %v728
      %v730 = vpop.f32.mrb[0].mxu0
      %v731 = vpop.f32.mrb[0].mxu0
      %v732 = vadd.f32 %v644, %v731
      %v733 = vpop.f32.mrb[0].mxu0
      %734 = vdwg.mxu0
      %735 = vst [vmem:[%s280] sm:$0xff] %v729
      %736 = vst [vmem:[%s280 + $0x8] sm:$0xff] %v732
      %s737 = smul.u32 2, %s18
      %p738 = scmp.lt.s32.totalorder %s737, 3
      %s739 = scalar_select %p738, %s737, 3
      %s740 = smul.addr %s739, 8
      %s741 = scalar_lea.vmem %s7, %s740
      // Predicated region
      $region49: #{fwd.1} parent=47 // pred_check
        %p742 = pneg %p188
      $region50: #{fwd.1} parent=47 // pred_check_branch
        %744 = sbr.rel (%p742) target = $region52
      $region51: #{fwd.1} parent=47 // pred_region
        %s745 = smul.u32 2, %s18
      $region52: #{fwd.1} parent=47 // pred_fallthru
        _
    $region48: #{fwd.1} parent=5 // pred_fallthru
      _
    %p746 = scmp.le.s32.totalorder 2, %s13
    // Predicated region
    $region53: #{fwd.1} parent=5 // pred_check
      %p747 = pneg %p746
    $region54: #{fwd.1} parent=5 // pred_check_branch
      %749 = sbr.rel (%p747) target = $region56
    $region55: #{fwd.1} parent=5 // pred_region
      %s750 = ssub.s32 %s13, 2
      // Predicated region
      $region57: #{fwd.1} parent=55 // pred_check
        %p751 = pneg %p194
      $region58: #{fwd.1} parent=55 // pred_check_branch
        %753 = sbr.rel (%p751) target = $region60
      $region59: #{fwd.1} parent=55 // pred_region
        %s754 = smul.u32 2, %s19
        %p755 = scmp.lt.s32.totalorder %s754, 3
        %s756 = scalar_select %p755, %s754, 3
        %s757 = smul.addr %s756, 8
        %s758 = scalar_lea.vmem %s7, %s757
      $region60: #{fwd.1} parent=55 // pred_fallthru
        _
    $region56: #{fwd.1} parent=5 // pred_fallthru
      _
  $region6: #{fwd.1} parent=0 // loop_footer
    %s17 = sadd.s32 1, %s13
  $region7: #{fwd.1} parent=0 // loop_footer_branch
    %12 = sbr.rel target = $region3
  $region8: #{fwd.1} parent=0 // loop_exit
    _

// kernel: fwd.1
$region0: #{fwd.1}
  #allocation0 [shape = 'u32[]', space=smem, size = 0x4, offset = 0x4, fixed_abs, tag = 'smem constant byte address 0x4 - core index']
  #allocation1 [shape = 'u32[144,128]{1,0:T(1,128)}', space=vmem, size = 0x12000, scoped, tag = 'internal scratch']
  %s0 = inlined_call_operand.vmem [shape: bf16[32,128], index: 0, kind: input, shape index: {}]
  %s1 = inlined_call_operand.vmem [shape: bf16[128,256], index: 1, kind: input, shape index: {}]
  %s2 = inlined_call_operand.vmem [shape: f32[1,256], index: 2, kind: input, shape index: {}]
  %s3 = inlined_call_operand.vmem [shape: bf16[128,256], index: 3, kind: input, shape index: {}]
  %s4 = inlined_call_operand.vmem [shape: f32[1,256], index: 4, kind: input, shape index: {}]
  %s5 = inlined_call_operand.vmem [shape: bf16[128,128], index: 5, kind: input, shape index: {}]
  %s6 = inlined_call_operand.vmem [shape: f32[1,128], index: 6, kind: input, shape index: {}]
  %s7 = inlined_call_operand.vmem [shape: f32[32,128], index: 7, kind: output, shape index: {}]
  %s8 = sld [smem:[#allocation0]]
  $region61: #{fwd.1} parent=0
    _
  %s10 = ssub.s32 1, %s8
  %s11 = scalar_select 0, %s10, %s8
  loop: start=0, step=1, limit=4
  $region2: #{fwd.1} parent=0 // loop_pre_header
    _
  $region3: #{fwd.1} parent=0 // loop_header
    %s13 = sphi 0, %s17
    %p14 = scmp.ge.s32.totalorder %s13, 4
    %s23 = sphi 0, %s25
    %s26 = sphi 0, %s23
    %s27 = sphi 0, %s26
    %s43 = sphi 0, %s27
    %s47 = sphi 0, %s47
    %s49 = sphi 0, %s47
    %s50 = sphi 0, %s49
    %s64 = sphi 0, %s50
    %s68 = sphi 0, %s68
    %s70 = sphi 0, %s68
    %s71 = sphi 0, %s70
    %s85 = sphi 0, %s71
    %s89 = sphi 0, %s89
    %s91 = sphi 0, %s89
    %s92 = sphi 0, %s91
    %s106 = sphi 0, %s92
    %s110 = sphi 0, %s110
    %s112 = sphi 0, %s110
    %s113 = sphi 0, %s112
    %s127 = sphi 0, %s113
    %s131 = sphi 0, %s131
    %s133 = sphi 0, %s131
    %s134 = sphi 0, %s133
    %s148 = sphi 0, %s134
    %s152 = sphi 0, %s152
    %s154 = sphi 0, %s152
    %s155 = sphi 0, %s154
    %s169 = sphi 0, %s155
    %s175 = sphi 0, %s177
    %s178 = sphi 0, %s175
    %s179 = sphi 0, %s178
    %s195 = sphi 0, %s179
  $region4: #{fwd.1} parent=0 // loop_header_branch
    %16 = sbr.rel (%p14) target = $region8
  $region5: #{fwd.1} parent=0 // loop_body
    %s18 = ssub.s32 %s13, 1
    %s19 = ssub.s32 %s13, 2
    %s20 = sadd.s32 %s13, 1
    %s21 = ssub.s32 %s13, %s20
    %p22 = scmp.eq.s32.totalorder %s21, 0
    %s24 = sadd.s32 %s23, 1
    %s25 = scalar_select %p22, %s23, %s24
    %p28 = pneg %p22
    %p29 = scmp.eq.s32.totalorder %s13, 1
    %p30 = por %p28, %p29
    %p31 = scmp.ne.s32.totalorder %s23, %s26
    %p32 = scmp.eq.s32.totalorder %s13, 0
    %p33 = por %p31, %p32
    %p34 = scmp.ne.s32.totalorder %s23, %s26
    %p35 = scmp.eq.s32.totalorder %s18, 1
    %p36 = por %p34, %p35
    %p37 = scmp.ne.s32.totalorder %s26, %s27
    %p38 = scmp.eq.s32.totalorder %s18, 0
    %p39 = por %p37, %p38
    %p40 = scmp.ne.s32.totalorder %s26, %s27
    %p41 = scmp.eq.s32.totalorder %s19, 1
    %p42 = por %p40, %p41
    %p44 = scmp.ne.s32.totalorder %s27, %s43
    %p45 = scmp.eq.s32.totalorder %s19, 0
    %p46 = por %p44, %p45
    %s48 = sadd.s32 %s47, 1
    %p51 = scmp.eq.s32.totalorder %s13, 1
    %p52 = scmp.ne.s32.totalorder %s47, %s49
    %p53 = scmp.eq.s32.totalorder %s13, 0
    %p54 = por %p52, %p53
    %p55 = scmp.ne.s32.totalorder %s47, %s49
    %p56 = scmp.eq.s32.totalorder %s18, 1
    %p57 = por %p55, %p56
    %p58 = scmp.ne.s32.totalorder %s49, %s50
    %p59 = scmp.eq.s32.totalorder %s18, 0
    %p60 = por %p58, %p59
    %p61 = scmp.ne.s32.totalorder %s49, %s50
    %p62 = scmp.eq.s32.totalorder %s19, 1
    %p63 = por %p61, %p62
    %p65 = scmp.ne.s32.totalorder %s50, %s64
    %p66 = scmp.eq.s32.totalorder %s19, 0
    %p67 = por %p65, %p66
    %s69 = sadd.s32 %s68, 1
    %p72 = scmp.eq.s32.totalorder %s13, 1
    %p73 = scmp.ne.s32.totalorder %s68, %s70
    %p74 = scmp.eq.s32.totalorder %s13, 0
    %p75 = por %p73, %p74
    %p76 = scmp.ne.s32.totalorder %s68, %s70
    %p77 = scmp.eq.s32.totalorder %s18, 1
    %p78 = por %p76, %p77
    %p79 = scmp.ne.s32.totalorder %s70, %s71
    %p80 = scmp.eq.s32.totalorder %s18, 0
    %p81 = por %p79, %p80
    %p82 = scmp.ne.s32.totalorder %s70, %s71
    %p83 = scmp.eq.s32.totalorder %s19, 1
    %p84 = por %p82, %p83
    %p86 = scmp.ne.s32.totalorder %s71, %s85
    %p87 = scmp.eq.s32.totalorder %s19, 0
    %p88 = por %p86, %p87
    %s90 = sadd.s32 %s89, 1
    %p93 = scmp.eq.s32.totalorder %s13, 1
    %p94 = scmp.ne.s32.totalorder %s89, %s91
    %p95 = scmp.eq.s32.totalorder %s13, 0
    %p96 = por %p94, %p95
    %p97 = scmp.ne.s32.totalorder %s89, %s91
    %p98 = scmp.eq.s32.totalorder %s18, 1
    %p99 = por %p97, %p98
    %p100 = scmp.ne.s32.totalorder %s91, %s92
    %p101 = scmp.eq.s32.totalorder %s18, 0
    %p102 = por %p100, %p101
    %p103 = scmp.ne.s32.totalorder %s91, %s92
    %p104 = scmp.eq.s32.totalorder %s19, 1
    %p105 = por %p103, %p104
    %p107 = scmp.ne.s32.totalorder %s92, %s106
    %p108 = scmp.eq.s32.totalorder %s19, 0
    %p109 = por %p107, %p108
    %s111 = sadd.s32 %s110, 1
    %p114 = scmp.eq.s32.totalorder %s13, 1
    %p115 = scmp.ne.s32.totalorder %s110, %s112
    %p116 = scmp.eq.s32.totalorder %s13, 0
    %p117 = por %p115, %p116
    %p118 = scmp.ne.s32.totalorder %s110, %s112
    %p119 = scmp.eq.s32.totalorder %s18, 1
    %p120 = por %p118, %p119
    %p121 = scmp.ne.s32.totalorder %s112, %s113
    %p122 = scmp.eq.s32.totalorder %s18, 0
    %p123 = por %p121, %p122
    %p124 = scmp.ne.s32.totalorder %s112, %s113
    %p125 = scmp.eq.s32.totalorder %s19, 1
    %p126 = por %p124, %p125
    %p128 = scmp.ne.s32.totalorder %s113, %s127
    %p129 = scmp.eq.s32.totalorder %s19, 0
    %p130 = por %p128, %p129
    %s132 = sadd.s32 %s131, 1
    %p135 = scmp.eq.s32.totalorder %s13, 1
    %p136 = scmp.ne.s32.totalorder %s131, %s133
    %p137 = scmp.eq.s32.totalorder %s13, 0
    %p138 = por %p136, %p137
    %p139 = scmp.ne.s32.totalorder %s131, %s133
    %p140 = scmp.eq.s32.totalorder %s18, 1
    %p141 = por %p139, %p140
    %p142 = scmp.ne.s32.totalorder %s133, %s134
    %p143 = scmp.eq.s32.totalorder %s18, 0
    %p144 = por %p142, %p143
    %p145 = scmp.ne.s32.totalorder %s133, %s134
    %p146 = scmp.eq.s32.totalorder %s19, 1
    %p147 = por %p145, %p146
    %p149 = scmp.ne.s32.totalorder %s134, %s148
    %p150 = scmp.eq.s32.totalorder %s19, 0
    %p151 = por %p149, %p150
    %s153 = sadd.s32 %s152, 1
    %p156 = scmp.eq.s32.totalorder %s13, 1
    %p157 = scmp.ne.s32.totalorder %s152, %s154
    %p158 = scmp.eq.s32.totalorder %s13, 0
    %p159 = por %p157, %p158
    %p160 = scmp.ne.s32.totalorder %s152, %s154
    %p161 = scmp.eq.s32.totalorder %s18, 1
    %p162 = por %p160, %p161
    %p163 = scmp.ne.s32.totalorder %s154, %s155
    %p164 = scmp.eq.s32.totalorder %s18, 0
    %p165 = por %p163, %p164
    %p166 = scmp.ne.s32.totalorder %s154, %s155
    %p167 = scmp.eq.s32.totalorder %s19, 1
    %p168 = por %p166, %p167
    %p170 = scmp.ne.s32.totalorder %s155, %s169
    %p171 = scmp.eq.s32.totalorder %s19, 0
    %p172 = por %p170, %p171
    %s173 = ssub.s32 %s13, %s20
    %p174 = scmp.eq.s32.totalorder %s173, 0
    %s176 = sadd.s32 %s175, 1
    %s177 = scalar_select %p174, %s175, %s176
    %p180 = pneg %p174
    %p181 = scmp.eq.s32.totalorder %s13, 1
    %p182 = por %p180, %p181
    %p183 = scmp.ne.s32.totalorder %s175, %s178
    %p184 = scmp.eq.s32.totalorder %s13, 0
    %p185 = por %p183, %p184
    %p186 = scmp.ne.s32.totalorder %s175, %s178
    %p187 = scmp.eq.s32.totalorder %s18, 1
    %p188 = por %p186, %p187
    %p189 = scmp.ne.s32.totalorder %s178, %s179
    %p190 = scmp.eq.s32.totalorder %s18, 0
    %p191 = por %p189, %p190
    %p192 = scmp.ne.s32.totalorder %s178, %s179
    %p193 = scmp.eq.s32.totalorder %s19, 1
    %p194 = por %p192, %p193
    %p196 = scmp.ne.s32.totalorder %s179, %s195
    %p197 = scmp.eq.s32.totalorder %s19, 0
    %p198 = por %p196, %p197
    %p199 = scmp.le.s32.totalorder 1, %s13
    %p200 = scmp.lt.s32.totalorder %s13, 3
    %p201 = pnand %p199, %p200
    %p202 = pneg %p201
    // Predicated region
    $region9: #{fwd.1} parent=5 // pred_check
      _
    $region10: #{fwd.1} parent=5 // pred_check_branch
      %204 = sbr.rel (%p201) target = $region12
    $region11: #{fwd.1} parent=5 // pred_region
      %s205 = ssub.s32 %s13, 1
      // Predicated region
      $region13: #{fwd.1} parent=11 // pred_check
        %p206 = pneg %p60
      $region14: #{fwd.1} parent=11 // pred_check_branch
        %208 = sbr.rel (%p206) target = $region16
      $region15: #{fwd.1} parent=11 // pred_region
        _
      $region16: #{fwd.1} parent=11 // pred_fallthru
        _
      // Predicated region
      $region17: #{fwd.1} parent=11 // pred_check
        %p209 = pneg %p81
      $region18: #{fwd.1} parent=11 // pred_check_branch
        %211 = sbr.rel (%p209) target = $region20
      $region19: #{fwd.1} parent=11 // pred_region
        _
      $region20: #{fwd.1} parent=11 // pred_fallthru
        _
      // Predicated region
      $region21: #{fwd.1} parent=11 // pred_check
        %p212 = pneg %p102
      $region22: #{fwd.1} parent=11 // pred_check_branch
        %214 = sbr.rel (%p212) target = $region24
      $region23: #{fwd.1} parent=11 // pred_region
        _
      $region24: #{fwd.1} parent=11 // pred_fallthru
        _
      // Predicated region
      $region25: #{fwd.1} parent=11 // pred_check
        %p215 = pneg %p123
      $region26: #{fwd.1} parent=11 // pred_check_branch
        %217 = sbr.rel (%p215) target = $region28
      $region27: #{fwd.1} parent=11 // pred_region
        _
      $region28: #{fwd.1} parent=11 // pred_fallthru
        _
      // Predicated region
      $region29: #{fwd.1} parent=11 // pred_check
        %p218 = pneg %p144
      $region30: #{fwd.1} parent=11 // pred_check_branch
        %220 = sbr.rel (%p218) target = $region32
      $region31: #{fwd.1} parent=11 // pred_region
        _
      $region32: #{fwd.1} parent=11 // pred_fallthru
        _
      // Predicated region
      $region33: #{fwd.1} parent=11 // pred_check
        %p221 = pneg %p165
      $region34: #{fwd.1} parent=11 // pred_check_branch
        %223 = sbr.rel (%p221) target = $region36
      $region35: #{fwd.1} parent=11 // pred_region
        _
      $region36: #{fwd.1} parent=11 // pred_fallthru
        _
    $region12: #{fwd.1} parent=5 // pred_fallthru
      _
    %p224 = scmp.lt.s32.totalorder %s13, 2
    // Predicated region
    $region37: #{fwd.1} parent=5 // pred_check
      %p225 = pneg %p224
    $region38: #{fwd.1} parent=5 // pred_check_branch
      %227 = sbr.rel (%p225) target = $region40
    $region39: #{fwd.1} parent=5 // pred_region
      // Predicated region
      $region41: #{fwd.1} parent=39 // pred_check
        %p228 = pneg %p33
      $region42: #{fwd.1} parent=39 // pred_check_branch
        %230 = sbr.rel (%p228) target = $region44
      $region43: #{fwd.1} parent=39 // pred_region
        %s231 = smul.u32 2, %s13
        %p232 = scmp.lt.s32.totalorder %s231, 3
        %s233 = scalar_select %p232, %s231, 3
        %s234 = smul.addr %s233, 4
        %s235 = scalar_lea.vmem %s0, %s234
        %s236 = smul.u32 2, %s13
      $region44: #{fwd.1} parent=39 // pred_fallthru
        _
    $region40: #{fwd.1} parent=5 // pred_fallthru
      _
    %p237 = scmp.le.s32.totalorder 1, %s13
    %p238 = scmp.lt.s32.totalorder %s13, 3
    %p239 = pnand %p237, %p238
    %p240 = pneg %p239
    // Predicated region
    $region45: #{fwd.1} parent=5 // pred_check
      _
    $region46: #{fwd.1} parent=5 // pred_check_branch
      %242 = sbr.rel (%p239) target = $region48
    $region47: #{fwd.1} parent=5 // pred_region
      %s243 = ssub.s32 %s13, 1
      %s244 = smul.u32 2, %s18
      %p245 = scmp.lt.s32.totalorder %s244, 3
      %s246 = scalar_select %p245, %s244, 3
      %s247 = smul.addr %s246, 4
      %s248 = scalar_lea.vmem %s0, %s247
      %p249 = pneg %p39
      %p250 = pneg %p36
      %p251 = pneg %p60
      %p252 = pneg %p57
      %p253 = pneg %p81
      %p254 = pneg %p78
      %p255 = pneg %p102
      %p256 = pneg %p99
      %p257 = pneg %p123
      %p258 = pneg %p120
      %p259 = pneg %p144
      %p260 = pneg %p141
      %p261 = pneg %p165
      %p262 = pneg %p162
      %p263 = pneg %p191
      %p264 = pneg %p188
      %s265 = smul.u32 2, %s18
      %p266 = scmp.lt.s32.totalorder %s265, 3
      %s267 = scalar_select %p266, %s265, 3
      %s268 = smul.addr %s267, 8
      %s269 = scalar_lea.vmem %s7, %s268
      %s270 = smul.u32 2, %s18
      %p271 = scmp.lt.s32.totalorder %s270, 3
      %s272 = scalar_select %p271, %s270, 3
      %s273 = smul.addr %s272, 4
      %s274 = scalar_lea.vmem %s0, %s273
      %s275 = smul.u32 2, %s18
      %s276 = smul.u32 2, %s18
      %p277 = scmp.lt.s32.totalorder %s276, 3
      %s278 = scalar_select %p277, %s276, 3
      %s279 = smul.addr %s278, 8
      %s280 = scalar_lea.vmem %s7, %s279
      %s281 = smul.u32 2, %s18
      %v283 = vld [vmem:[%s274] sm:$0xf]
      %v284 = vld [vmem:[%s274 + $0x4] sm:$0xf]
      %v285 = vld [vmem:[%s1] sm:$0xff]
      %v286 = vld [vmem:[%s1 + $0x8] sm:$0xff]
      %v287 = vld [vmem:[%s1 + $0x10] sm:$0xff]
      %v288 = vld [vmem:[%s1 + $0x18] sm:$0xff]
      %v289 = vld [vmem:[%s1 + $0x20] sm:$0xff]
      %v290 = vld [vmem:[%s1 + $0x28] sm:$0xff]
      %v291 = vld [vmem:[%s1 + $0x30] sm:$0xff]
      %v292 = vld [vmem:[%s1 + $0x38] sm:$0xff]
      %v293 = vld [vmem:[%s1 + $0x40] sm:$0xff]
      %v294 = vld [vmem:[%s1 + $0x48] sm:$0xff]
      %v295 = vld [vmem:[%s1 + $0x50] sm:$0xff]
      %v296 = vld [vmem:[%s1 + $0x58] sm:$0xff]
      %v297 = vld [vmem:[%s1 + $0x60] sm:$0xff]
      %v298 = vld [vmem:[%s1 + $0x68] sm:$0xff]
      %v299 = vld [vmem:[%s1 + $0x70] sm:$0xff]
      %v300 = vld [vmem:[%s1 + $0x78] sm:$0xff]
      %v301 = vld [vmem:[%s2] sm:$0x3]
      %v303 = vlaneseq
      %v304 = vshrl.u32 %v303, 7
      %v305 = vsub.s32 0, %v304
      %v306 = vrot.slane %v301, %v305
      %v307 = vlaneseq
      %v308 = vshrl.u32 %v307, 7
      %v309 = vsub.s32 1, %v308
      %v310 = vrot.slane %v301, %v309
      %v315 = vunpack.c.l.b16 %v283
      %v316 = vunpack.c.l.b16 %v284
      %v317 = vpack.c.b16 %v316, %v315
      %v335 = vunpack.c.l.b16 %v285
      %v336 = vunpack.c.h.b16 %v285
      %v337 = vunpack.c.l.b16 %v286
      %v338 = vunpack.c.h.b16 %v286
      %v339 = vunpack.c.l.b16 %v287
      %v340 = vunpack.c.h.b16 %v287
      %v341 = vunpack.c.l.b16 %v288
      %v342 = vunpack.c.h.b16 %v288
      %v343 = vunpack.c.l.b16 %v289
      %v344 = vunpack.c.h.b16 %v289
      %v345 = vunpack.c.l.b16 %v290
      %v346 = vunpack.c.h.b16 %v290
      %v347 = vunpack.c.l.b16 %v291
      %v348 = vunpack.c.h.b16 %v291
      %v349 = vunpack.c.l.b16 %v292
      %v350 = vunpack.c.h.b16 %v292
      %v351 = vunpack.c.l.b16 %v293
      %v352 = vunpack.c.h.b16 %v293
      %v353 = vunpack.c.l.b16 %v294
      %v354 = vunpack.c.h.b16 %v294
      %v355 = vunpack.c.l.b16 %v295
      %v356 = vunpack.c.h.b16 %v295
      %v357 = vunpack.c.l.b16 %v296
      %v358 = vunpack.c.h.b16 %v296
      %v359 = vunpack.c.l.b16 %v297
      %v360 = vunpack.c.h.b16 %v297
      %v361 = vunpack.c.l.b16 %v298
      %v362 = vunpack.c.h.b16 %v298
      %v363 = vunpack.c.l.b16 %v299
      %v364 = vunpack.c.h.b16 %v299
      %v365 = vunpack.c.l.b16 %v300
      %v366 = vunpack.c.h.b16 %v300
      %v367 = vpack.c.b16 %v337, %v335
      %v368 = vpack.c.b16 %v338, %v336
      %v369 = vpack.c.b16 %v341, %v339
      %v370 = vpack.c.b16 %v342, %v340
      %v371 = vpack.c.b16 %v345, %v343
      %v372 = vpack.c.b16 %v346, %v344
      %v373 = vpack.c.b16 %v349, %v347
      %v374 = vpack.c.b16 %v350, %v348
      %v375 = vpack.c.b16 %v353, %v351
      %v376 = vpack.c.b16 %v354, %v352
      %v377 = vpack.c.b16 %v357, %v355
      %v378 = vpack.c.b16 %v358, %v356
      %v379 = vpack.c.b16 %v361, %v359
      %v380 = vpack.c.b16 %v362, %v360
      %v381 = vpack.c.b16 %v365, %v363
      %v382 = vpack.c.b16 %v366, %v364
      %399 = vmatprep.subr.bf16.mxu0 %v368
      %400 = vmatpush1.bf16.msra.mxu0 %v367
      %401 = vmatprep.subr.bf16.mxu0 %v370
      %402 = vmatpush1.bf16.msra.mxu0 %v369
      %403 = vmatprep.subr.bf16.mxu0 %v372
      %404 = vmatpush1.bf16.msra.mxu0 %v371
      %405 = vmatprep.subr.bf16.mxu0 %v374
      %406 = vmatpush1.bf16.msra.mxu0 %v373
      %407 = vmatprep.subr.bf16.mxu0 %v376
      %408 = vmatpush1.bf16.msra.mxu0 %v375
      %409 = vmatprep.subr.bf16.mxu0 %v378
      %410 = vmatpush1.bf16.msra.mxu0 %v377
      %411 = vmatprep.subr.bf16.mxu0 %v380
      %412 = vmatpush1.bf16.msra.mxu0 %v379
      %413 = vmatprep.subr.bf16.mxu0 %v382
      %414 = vmatpush1.bf16.msra.mxu0 %v381
      %415 = vmatprep.subr.bf16.mxu0 0
      %416 = vmatpush1.bf16.msra.mxu0 0
      %417 = vmatprep.subr.bf16.mxu0 0
      %418 = vmatpush1.bf16.msra.mxu0 0
      %419 = vmatprep.subr.bf16.mxu0 0
      %420 = vmatpush1.bf16.msra.mxu0 0
      %421 = vmatprep.subr.bf16.mxu0 0
      %422 = vmatpush1.bf16.msra.mxu0 0
      %423 = vmatprep.subr.bf16.mxu0 0
      %424 = vmatpush1.bf16.msra.mxu0 0
      %425 = vmatprep.subr.bf16.mxu0 0
      %426 = vmatpush1.bf16.msra.mxu0 0
      %427 = vmatprep.subr.bf16.mxu0 0
      %428 = vmatpush1.bf16.msra.mxu0 0
      %429 = vmatprep.subr.bf16.mxu0 0
      %430 = vmatpush1.bf16.msra.mxu0 0
      %431 = vmatprep.mubr.bf16.mxu0 0
      %432 = vmatmul.mubr.bf16.gmra.mrb[0].mxu0 %v317
      %v433 = vpop.f32.mrb[0].mxu0
      %v434 = vadd.f32 %v306, %v433
      %v435 = vpop.f32.mrb[0].mxu0
      %v436 = vadd.f32 %v310, %v435
      %v437 = vpop.f32.mrb[0].mxu0
      %v438 = vadd.f32 %v306, %v437
      %v439 = vpop.f32.mrb[0].mxu0
      %v440 = vadd.f32 %v310, %v439
      %441 = vdwg.mxu0
      %v442 = vxor.u32 %v436, 2147483648
      %v443 = vxor.u32 %v440, 2147483648
      %v444 = vmul.f32 %v442, 1.442695
      %v445 = vpow.pop %v444
      %v446 = vmul.f32 %v443, 1.442695
      %v447 = vpow.pop %v446
      %v448 = vadd.f32 %v445, 1.0
      %v449 = vadd.f32 %v447, 1.0
      %v450 = vrcp.pop %v448
      %v451 = vmul.f32 1.0, %v450
      %v452 = vrcp.pop %v449
      %v453 = vmul.f32 1.0, %v452
      %v454 = vmul.f32 %v434, %v451
      %v455 = vmul.f32 %v438, %v453
      %v456 = vpack.c.bf16 %v455, %v454
      %v457 = vld [vmem:[%s3] sm:$0xff]
      %v458 = vld [vmem:[%s3 + $0x8] sm:$0xff]
      %v459 = vld [vmem:[%s3 + $0x10] sm:$0xff]
      %v460 = vld [vmem:[%s3 + $0x18] sm:$0xff]
      %v461 = vld [vmem:[%s3 + $0x20] sm:$0xff]
      %v462 = vld [vmem:[%s3 + $0x28] sm:$0xff]
      %v463 = vld [vmem:[%s3 + $0x30] sm:$0xff]
      %v464 = vld [vmem:[%s3 + $0x38] sm:$0xff]
      %v465 = vld [vmem:[%s3 + $0x40] sm:$0xff]
      %v466 = vld [vmem:[%s3 + $0x48] sm:$0xff]
      %v467 = vld [vmem:[%s3 + $0x50] sm:$0xff]
      %v468 = vld [vmem:[%s3 + $0x58] sm:$0xff]
      %v469 = vld [vmem:[%s3 + $0x60] sm:$0xff]
      %v470 = vld [vmem:[%s3 + $0x68] sm:$0xff]
      %v471 = vld [vmem:[%s3 + $0x70] sm:$0xff]
      %v472 = vld [vmem:[%s3 + $0x78] sm:$0xff]
      %v473 = vld [vmem:[%s4] sm:$0x3]
      %v475 = vlaneseq
      %v476 = vshrl.u32 %v475, 7
      %v477 = vsub.s32 0, %v476
      %v478 = vrot.slane %v473, %v477
      %v479 = vlaneseq
      %v480 = vshrl.u32 %v479, 7
      %v481 = vsub.s32 1, %v480
      %v482 = vrot.slane %v473, %v481
      %v501 = vunpack.c.l.b16 %v457
      %v502 = vunpack.c.h.b16 %v457
      %v503 = vunpack.c.l.b16 %v458
      %v504 = vunpack.c.h.b16 %v458
      %v505 = vunpack.c.l.b16 %v459
      %v506 = vunpack.c.h.b16 %v459
      %v507 = vunpack.c.l.b16 %v460
      %v508 = vunpack.c.h.b16 %v460
      %v509 = vunpack.c.l.b16 %v461
      %v510 = vunpack.c.h.b16 %v461
      %v511 = vunpack.c.l.b16 %v462
      %v512 = vunpack.c.h.b16 %v462
      %v513 = vunpack.c.l.b16 %v463
      %v514 = vunpack.c.h.b16 %v463
      %v515 = vunpack.c.l.b16 %v464
      %v516 = vunpack.c.h.b16 %v464
      %v517 = vunpack.c.l.b16 %v465
      %v518 = vunpack.c.h.b16 %v465
      %v519 = vunpack.c.l.b16 %v466
      %v520 = vunpack.c.h.b16 %v466
      %v521 = vunpack.c.l.b16 %v467
      %v522 = vunpack.c.h.b16 %v467
      %v523 = vunpack.c.l.b16 %v468
      %v524 = vunpack.c.h.b16 %v468
      %v525 = vunpack.c.l.b16 %v469
      %v526 = vunpack.c.h.b16 %v469
      %v527 = vunpack.c.l.b16 %v470
      %v528 = vunpack.c.h.b16 %v470
      %v529 = vunpack.c.l.b16 %v471
      %v530 = vunpack.c.h.b16 %v471
      %v531 = vunpack.c.l.b16 %v472
      %v532 = vunpack.c.h.b16 %v472
      %v533 = vpack.c.b16 %v503, %v501
      %v534 = vpack.c.b16 %v504, %v502
      %v535 = vpack.c.b16 %v507, %v505
      %v536 = vpack.c.b16 %v508, %v506
      %v537 = vpack.c.b16 %v511, %v509
      %v538 = vpack.c.b16 %v512, %v510
      %v539 = vpack.c.b16 %v515, %v513
      %v540 = vpack.c.b16 %v516, %v514
      %v541 = vpack.c.b16 %v519, %v517
      %v542 = vpack.c.b16 %v520, %v518
      %v543 = vpack.c.b16 %v523, %v521
      %v544 = vpack.c.b16 %v524, %v522
      %v545 = vpack.c.b16 %v527, %v525
      %v546 = vpack.c.b16 %v528, %v526
      %v547 = vpack.c.b16 %v531, %v529
      %v548 = vpack.c.b16 %v532, %v530
      %565 = vmatprep.subr.bf16.mxu0 %v534
      %566 = vmatpush1.bf16.msra.mxu0 %v533
      %567 = vmatprep.subr.bf16.mxu0 %v536
      %568 = vmatpush1.bf16.msra.mxu0 %v535
      %569 = vmatprep.subr.bf16.mxu0 %v538
      %570 = vmatpush1.bf16.msra.mxu0 %v537
      %571 = vmatprep.subr.bf16.mxu0 %v540
      %572 = vmatpush1.bf16.msra.mxu0 %v539
      %573 = vmatprep.subr.bf16.mxu0 %v542
      %574 = vmatpush1.bf16.msra.mxu0 %v541
      %575 = vmatprep.subr.bf16.mxu0 %v544
      %576 = vmatpush1.bf16.msra.mxu0 %v543
      %577 = vmatprep.subr.bf16.mxu0 %v546
      %578 = vmatpush1.bf16.msra.mxu0 %v545
      %579 = vmatprep.subr.bf16.mxu0 %v548
      %580 = vmatpush1.bf16.msra.mxu0 %v547
      %581 = vmatprep.subr.bf16.mxu0 0
      %582 = vmatpush1.bf16.msra.mxu0 0
      %583 = vmatprep.subr.bf16.mxu0 0
      %584 = vmatpush1.bf16.msra.mxu0 0
      %585 = vmatprep.subr.bf16.mxu0 0
      %586 = vmatpush1.bf16.msra.mxu0 0
      %587 = vmatprep.subr.bf16.mxu0 0
      %588 = vmatpush1.bf16.msra.mxu0 0
      %589 = vmatprep.subr.bf16.mxu0 0
      %590 = vmatpush1.bf16.msra.mxu0 0
      %591 = vmatprep.subr.bf16.mxu0 0
      %592 = vmatpush1.bf16.msra.mxu0 0
      %593 = vmatprep.subr.bf16.mxu0 0
      %594 = vmatpush1.bf16.msra.mxu0 0
      %595 = vmatprep.subr.bf16.mxu0 0
      %596 = vmatpush1.bf16.msra.mxu0 0
      %597 = vmatprep.mubr.bf16.mxu0 0
      %598 = vmatmul.mubr.bf16.gmra.mrb[0].mxu0 %v456
      %v599 = vpop.f32.mrb[0].mxu0
      %v600 = vadd.f32 %v478, %v599
      %v601 = vpop.f32.mrb[0].mxu0
      %v602 = vadd.f32 %v482, %v601
      %v603 = vpop.f32.mrb[0].mxu0
      %v604 = vadd.f32 %v478, %v603
      %v605 = vpop.f32.mrb[0].mxu0
      %v606 = vadd.f32 %v482, %v605
      %607 = vdwg.mxu0
      %v608 = vxor.u32 %v602, 2147483648
      %v609 = vxor.u32 %v606, 2147483648
      %v610 = vmul.f32 %v608, 1.442695
      %v611 = vpow.pop %v610
      %v612 = vmul.f32 %v609, 1.442695
      %v613 = vpow.pop %v612
      %v614 = vadd.f32 %v611, 1.0
      %v615 = vadd.f32 %v613, 1.0
      %v616 = vrcp.pop %v614
      %v617 = vmul.f32 1.0, %v616
      %v618 = vrcp.pop %v615
      %v619 = vmul.f32 1.0, %v618
      %v620 = vmul.f32 %v600, %v617
      %v621 = vmul.f32 %v604, %v619
      %v622 = vpack.c.bf16 %v621, %v620
      %v623 = vld [vmem:[%s5] sm:$0xf]
      %v624 = vld [vmem:[%s5 + $0x4] sm:$0xf]
      %v625 = vld [vmem:[%s5 + $0x8] sm:$0xf]
      %v626 = vld [vmem:[%s5 + $0xc] sm:$0xf]
      %v627 = vld [vmem:[%s5 + $0x10] sm:$0xf]
      %v628 = vld [vmem:[%s5 + $0x14] sm:$0xf]
      %v629 = vld [vmem:[%s5 + $0x18] sm:$0xf]
      %v630 = vld [vmem:[%s5 + $0x1c] sm:$0xf]
      %v631 = vld [vmem:[%s5 + $0x20] sm:$0xf]
      %v632 = vld [vmem:[%s5 + $0x24] sm:$0xf]
      %v633 = vld [vmem:[%s5 + $0x28] sm:$0xf]
      %v634 = vld [vmem:[%s5 + $0x2c] sm:$0xf]
      %v635 = vld [vmem:[%s5 + $0x30] sm:$0xf]
      %v636 = vld [vmem:[%s5 + $0x34] sm:$0xf]
      %v637 = vld [vmem:[%s5 + $0x38] sm:$0xf]
      %v638 = vld [vmem:[%s5 + $0x3c] sm:$0xf]
      %v639 = vld [vmem:[%s6] sm:$0x1]
      %v641 = vlaneseq
      %v642 = vshrl.u32 %v641, 7
      %v643 = vsub.s32 0, %v642
      %v644 = vrot.slane %v639, %v643
      %v662 = vunpack.c.l.b16 %v623
      %v663 = vunpack.c.l.b16 %v624
      %v664 = vunpack.c.l.b16 %v625
      %v665 = vunpack.c.l.b16 %v626
      %v666 = vunpack.c.l.b16 %v627
      %v667 = vunpack.c.l.b16 %v628
      %v668 = vunpack.c.l.b16 %v629
      %v669 = vunpack.c.l.b16 %v630
      %v670 = vunpack.c.l.b16 %v631
      %v671 = vunpack.c.l.b16 %v632
      %v672 = vunpack.c.l.b16 %v633
      %v673 = vunpack.c.l.b16 %v634
      %v674 = vunpack.c.l.b16 %v635
      %v675 = vunpack.c.l.b16 %v636
      %v676 = vunpack.c.l.b16 %v637
      %v677 = vunpack.c.l.b16 %v638
      %v678 = vpack.c.b16 %v663, %v662
      %v679 = vpack.c.b16 %v665, %v664
      %v680 = vpack.c.b16 %v667, %v666
      %v681 = vpack.c.b16 %v669, %v668
      %v682 = vpack.c.b16 %v671, %v670
      %v683 = vpack.c.b16 %v673, %v672
      %v684 = vpack.c.b16 %v675, %v674
      %v685 = vpack.c.b16 %v677, %v676
      %694 = vmatprep.subr.bf16.mxu0 0
      %695 = vmatpush1.bf16.msra.mxu0 %v678
      %696 = vmatprep.subr.bf16.mxu0 0
      %697 = vmatpush1.bf16.msra.mxu0 %v679
      %698 = vmatprep.subr.bf16.mxu0 0
      %699 = vmatpush1.bf16.msra.mxu0 %v680
      %700 = vmatprep.subr.bf16.mxu0 0
      %701 = vmatpush1.bf16.msra.mxu0 %v681
      %702 = vmatprep.subr.bf16.mxu0 0
      %703 = vmatpush1.bf16.msra.mxu0 %v682
      %704 = vmatprep.subr.bf16.mxu0 0
      %705 = vmatpush1.bf16.msra.mxu0 %v683
      %706 = vmatprep.subr.bf16.mxu0 0
      %707 = vmatpush1.bf16.msra.mxu0 %v684
      %708 = vmatprep.subr.bf16.mxu0 0
      %709 = vmatpush1.bf16.msra.mxu0 %v685
      %710 = vmatprep.subr.bf16.mxu0 0
      %711 = vmatpush1.bf16.msra.mxu0 0
      %712 = vmatprep.subr.bf16.mxu0 0
      %713 = vmatpush1.bf16.msra.mxu0 0
      %714 = vmatprep.subr.bf16.mxu0 0
      %715 = vmatpush1.bf16.msra.mxu0 0
      %716 = vmatprep.subr.bf16.mxu0 0
      %717 = vmatpush1.bf16.msra.mxu0 0
      %718 = vmatprep.subr.bf16.mxu0 0
      %719 = vmatpush1.bf16.msra.mxu0 0
      %720 = vmatprep.subr.bf16.mxu0 0
      %721 = vmatpush1.bf16.msra.mxu0 0
      %722 = vmatprep.subr.bf16.mxu0 0
      %723 = vmatpush1.bf16.msra.mxu0 0
      %724 = vmatprep.subr.bf16.mxu0 0
      %725 = vmatpush1.bf16.msra.mxu0 0
      %726 = vmatprep.mubr.bf16.mxu0 0
      %727 = vmatmul.mubr.bf16.gmra.mrb[0].mxu0 %v622
      %v728 = vpop.f32.mrb[0].mxu0
      %v729 = vadd.f32 %v644, %v728
      %v730 = vpop.f32.mrb[0].mxu0
      %v731 = vpop.f32.mrb[0].mxu0
      %v732 = vadd.f32 %v644, %v731
      %v733 = vpop.f32.mrb[0].mxu0
      %734 = vdwg.mxu0
      %735 = vst [vmem:[%s280] sm:$0xff] %v729
      %736 = vst [vmem:[%s280 + $0x8] sm:$0xff] %v732
      %s737 = smul.u32 2, %s18
      %p738 = scmp.lt.s32.totalorder %s737, 3
      %s739 = scalar_select %p738, %s737, 3
      %s740 = smul.addr %s739, 8
      %s741 = scalar_lea.vmem %s7, %s740
      // Predicated region
      $region49: #{fwd.1} parent=47 // pred_check
        %p742 = pneg %p188
      $region50: #{fwd.1} parent=47 // pred_check_branch
        %744 = sbr.rel (%p742) target = $region52
      $region51: #{fwd.1} parent=47 // pred_region
        %s745 = smul.u32 2, %s18
      $region52: #{fwd.1} parent=47 // pred_fallthru
        _
    $region48: #{fwd.1} parent=5 // pred_fallthru
      _
    %p746 = scmp.le.s32.totalorder 2, %s13
    // Predicated region
    $region53: #{fwd.1} parent=5 // pred_check
      %p747 = pneg %p746
    $region54: #{fwd.1} parent=5 // pred_check_branch
      %749 = sbr.rel (%p747) target = $region56
    $region55: #{fwd.1} parent=5 // pred_region
      %s750 = ssub.s32 %s13, 2
      // Predicated region
      $region57: #{fwd.1} parent=55 // pred_check
        %p751 = pneg %p194
      $region58: #{fwd.1} parent=55 // pred_check_branch
        %753 = sbr.rel (%p751) target = $region60
      $region59: #{fwd.1} parent=55 // pred_region
        %s754 = smul.u32 2, %s19
        %p755 = scmp.lt.s32.totalorder %s754, 3
        %s756 = scalar_select %p755, %s754, 3
        %s757 = smul.addr %s756, 8
        %s758 = scalar_lea.vmem %s7, %s757
      $region60: #{fwd.1} parent=55 // pred_fallthru
        _
    $region56: #{fwd.1} parent=5 // pred_fallthru
      _
  $region6: #{fwd.1} parent=0 // loop_footer
    %s17 = sadd.s32 1, %s13
  $region7: #{fwd.1} parent=0 // loop_footer_branch
    %12 = sbr.rel target = $region3
  $region8: #{fwd.1} parent=0 // loop_exit
    _

</llo_original>
